<compile_context>
chip_gen: v7x
topology: tpu7x:2x2x1
jax: 0.10.0
libtpu: 0.0.40
codegen_flags: <defaults>
</compile_context>

<pallas_src>
import functools

import jax
import jax.numpy as jnp
from jax import lax
from jax.experimental import pallas as pl
from jax.experimental.pallas import tpu as pltpu

LEAKY_ALPHA = 0.2                # GAT leaky-relu negative slope (DAEGC default)
STUDENT_V = 1.0                  # student-t degrees of freedom (v = 1)
LANE = 128                       # TPU vreg lane width; feature dims padded to this
A_PRED_DTYPE = jnp.bfloat16      # decoder output dtype (set to f32 if downstream
                                 # strictly requires full precision)


# ---------------------------------------------------------------------------
# generation-aware sizing helpers
# ---------------------------------------------------------------------------
def _round_up(x, m):
    return ((x + m - 1) // m) * m


def _vmem_budget_bytes():
    """Scoped-VMEM budget: ~half of physical VMEM, clamped to [32, 64] MiB.
    128 MiB parts (v5e/v6e) -> 64 MiB; 64 MiB parts (v7x) -> 32 MiB."""
    cap = 64 * 1024 * 1024       # conservative fallback if the query fails
    try:
        info = pltpu.get_tpu_info()
        for attr in ("vmem_capacity_bytes", "vmem_bytes", "vmem_size_bytes"):
            val = getattr(info, attr, None)
            if val:
                cap = int(val)
                break
    except Exception:
        pass
    return int(max(32 * 1024 * 1024, min(cap // 2, 64 * 1024 * 1024)))


def _largest_divisor_tile(n_pad, cap, step=8):
    """Largest multiple-of-`step` divisor of n_pad that is <= cap."""
    cap = max(step, min(int(cap), n_pad))
    cap -= cap % step
    t = cap
    while t >= step:
        if n_pad % t == 0:
            return t
        t -= step
    return step


def _decoder_row_tile(n_pad, budget, max_tile=None):
    # 2 double-buffered bf16 (tile, n_pad) output blocks + resident f32 z.
    z_bytes = 2 * n_pad * LANE * 4
    avail = max(budget * 3 // 4 - z_bytes, 0)
    cap = min(max_tile or 512, max(8, avail // (4 * n_pad)))
    return _largest_divisor_tile(n_pad, cap)


def _encoder_row_tile(n_pad, budget, max_tile=None):
    # bf16 adj+m tiles double-buffered (~8*T*N) + ~3 f32 (T, N) temporaries
    # (~12*T*N) + resident f32 h (n_pad x LANE).
    h_bytes = 2 * n_pad * LANE * 4
    avail = max(budget * 3 // 4 - h_bytes, 0)
    cap = min(max_tile or 512, max(8, avail // (20 * n_pad)))
    return _largest_divisor_tile(n_pad, cap)


def _fused_encoder_fits(n_pad, budget):
    """Rough live-set estimate of the single-block fused encoder."""
    approx = 20 * n_pad * n_pad + 6 * n_pad * LANE * 4
    return approx <= budget * 9 // 10


def _resident_spec(shape):
    """Constant-index BlockSpec for an operand that stays resident across the
    grid.  Single-buffered (pl.Buffered(1)) when the installed JAX supports
    the pipeline_mode kwarg (drops the pointless second VMEM buffer)."""
    index_map = lambda i: (0,) * len(shape)
    try:
        return pl.BlockSpec(shape, index_map, pipeline_mode=pl.Buffered(1))
    except Exception:
        return pl.BlockSpec(shape, index_map)


def _contract_last(a, b):
    """a:(M,F) . b:(N,F) -> (M,N) f32, contracting the last (lane) dim of both.
    Flash-attention style: MXU consumes the transposed operand directly, no
    XLU transpose is materialized."""
    return lax.dot_general(a, b, (((1,), (1,)), ((), ())),
                           preferred_element_type=jnp.float32)


# ---------------------------------------------------------------------------
# shared in-kernel math (used by both the fused and the row-tiled encoder)
# ---------------------------------------------------------------------------
def _gat_attention_rows(h_all, h_rows, adj_rows, m_rows, a_self, a_neigh, alpha):
    """GAT attention + aggregation for a block of rows.

    h_all:    (N, LANE) f32  transformed features of ALL nodes (values)
    h_rows:   (T, LANE) f32  rows owned by this block
    adj_rows: (T, N)   bf16  adjacency rows for this block
    m_rows:   (T, N)         proximity rows for this block
    Returns elu(softmax(leakyrelu((h a_s + (h a_n)^T) * M), masked by adj) @ h)
    for the T rows, in f32.
    """
    # attn_for_self: (T, 1) -- lane reduce straight to sublane orientation.
    attn_self = jnp.sum(h_rows * a_self, axis=1, keepdims=True)
    # attn_for_neighs^T: (1, N) directly off the MXU (no cross-lane relayout).
    attn_neigh_t = _contract_last(a_neigh, h_all)
    attn = (attn_self + attn_neigh_t) * m_rows.astype(jnp.float32)
    attn = jnp.where(attn > 0, attn, alpha * attn)            # LeakyReLU(alpha)
    masked = jnp.where(adj_rows > 0, attn, -9e15)
    mx = jnp.max(masked, axis=1, keepdims=True)               # softmax(dim=1)
    e = jnp.exp(masked - mx)
    # EUP approx reciprocal frees VALU slots over the (T, N) region; rows sum
    # to 1 within ~2^-12 (accepted deviation from the f32 reference).
    attention = e * pl.reciprocal(jnp.sum(e, axis=1, keepdims=True), approx=True)
    h_prime = jnp.dot(attention.astype(jnp.bfloat16),
                      h_all.astype(jnp.bfloat16),
                      preferred_element_type=jnp.float32)
    # ELU; exp() guarded so large positive activations never produce inf.
    return jnp.where(h_prime > 0, h_prime,
                     jnp.exp(jnp.minimum(h_prime, 0.0)) - 1.0)


def _normalize_and_q(h2_rows, c, v):
    """z = l2-normalize(h2, dim=1); q = student-t soft assignment (row-local)."""
    nrm2 = jnp.sum(h2_rows * h2_rows, axis=1, keepdims=True)
    z = h2_rows * lax.rsqrt(jnp.maximum(nrm2, 1e-24))
    # ||z_i - c_k||^2 = 1 - 2 z.c + ||c_k||^2  (||z_i|| == 1 after normalize);
    # clamp >= 0 against cancellation.
    c2 = jnp.sum(c * c, axis=1)[None, :]
    cross = _contract_last(z, c)                  # no c.T materialized
    dist = jnp.maximum(1.0 - 2.0 * cross + c2, 0.0)
    q = 1.0 / (1.0 + dist / v)
    if (v + 1.0) / 2.0 != 1.0:                    # identity for the default v = 1
        q = q ** ((v + 1.0) / 2.0)
    # Exact row-normalization keeps sum_k q == 1 to f32 precision.
    return z, q / jnp.sum(q, axis=1, keepdims=True)


# ---------------------------------------------------------------------------
# Encoder path A (small N, launch-bound): fully fused single pallas_call
#   GAT layer 1 -> GAT layer 2 -> l2-normalize -> get_Q ; h1/h2 stay in VMEM.
# ---------------------------------------------------------------------------
def _daegc_fused_encode_kernel(x_ref, adj_ref, m_ref,
                               w1_ref, a_s1_ref, a_n1_ref,
                               w2_ref, a_s2_ref, a_n2_ref,
                               c_ref, z_ref, q_ref, *, alpha, v):
    adj = adj_ref[...]                                  # (N, N) bf16
    m = m_ref[...].astype(jnp.float32)                  # cast once, reused twice

    def gat_layer(x_in, w_ref, a_s_ref, a_n_ref):
        h = jnp.dot(x_in.astype(jnp.bfloat16),
                    w_ref[...].astype(jnp.bfloat16),
                    preferred_element_type=jnp.float32)  # (N, LANE) f32
        return _gat_attention_rows(h, h, adj, m,
                                   a_s_ref[...], a_n_ref[...], alpha)

    h1 = gat_layer(x_ref[...], w1_ref, a_s1_ref, a_n1_ref)   # stays in VMEM
    h2 = gat_layer(h1, w2_ref, a_s2_ref, a_n2_ref)            # stays in VMEM
    z, q = _normalize_and_q(h2, c_ref[...], v)
    z_ref[...] = z
    q_ref[...] = q


def gat_encode_q_fused(x, adj, m, params, *, alpha, v, budget):
    n_pad = x.shape[0]
    k = params["cluster"].shape[0]
    kernel = functools.partial(_daegc_fused_encode_kernel, alpha=alpha, v=v)
    return pl.pallas_call(
        kernel,
        grid=(1,),
        in_specs=[_resident_spec(x.shape), _resident_spec(adj.shape),
                  _resident_spec(m.shape),
                  _resident_spec(params["w1"].shape),
                  _resident_spec(params["a_self1"].shape),
                  _resident_spec(params["a_neigh1"].shape),
                  _resident_spec(params["w2"].shape),
                  _resident_spec(params["a_self2"].shape),
                  _resident_spec(params["a_neigh2"].shape),
                  _resident_spec(params["cluster"].shape)],
        out_specs=(pl.BlockSpec((n_pad, LANE), lambda i: (0, 0)),
                   pl.BlockSpec((n_pad, k), lambda i: (0, 0))),
        out_shape=(jax.ShapeDtypeStruct((n_pad, LANE), jnp.float32),
                   jax.ShapeDtypeStruct((n_pad, k), jnp.float32)),
        compiler_params=pltpu.CompilerParams(
            dimension_semantics=("arbitrary",),
            vmem_limit_bytes=budget),
    )(x, adj, m,
      params["w1"], params["a_self1"], params["a_neigh1"],
      params["w2"], params["a_self2"], params["a_neigh2"],
      params["cluster"])


# ---------------------------------------------------------------------------
# Encoder path B (large N / v7x megacore): row-tiled, "parallel" grid axis.
#   K0: h1_raw = x @ W1
#   K1: h2_raw = elu(attention1 @ h1_raw) @ W2      (adj/M streamed per tile)
#   K2: z, q  = get_Q(l2norm(elu(attention2 @ h2_raw)))
# ---------------------------------------------------------------------------
def _xw_kernel(x_ref, w_ref, h_ref):
    h_ref[...] = jnp.dot(x_ref[...].astype(jnp.bfloat16),
                         w_ref[...].astype(jnp.bfloat16),
                         preferred_element_type=jnp.float32)


def _gat_mid_tile_kernel(adj_ref, m_ref, h_ref, a_s_ref, a_n_ref, w_next_ref,
                         out_ref, *, tile, alpha):
    start = pl.multiple_of(pl.program_id(0) * tile, tile)
    h_all = h_ref[...]
    h_rows = h_ref[pl.ds(start, tile), :]
    hp = _gat_attention_rows(h_all, h_rows, adj_ref[...], m_ref[...],
                             a_s_ref[...], a_n_ref[...], alpha)
    # Fold the next layer's input transform in: out = h1 @ W2.
    out_ref[...] = jnp.dot(hp.astype(jnp.bfloat16),
                           w_next_ref[...].astype(jnp.bfloat16),
                           preferred_element_type=jnp.float32)


def _gat_final_tile_kernel(adj_ref, m_ref, h_ref, a_s_ref, a_n_ref, c_ref,
                           z_ref, q_ref, *, tile, alpha, v):
    start = pl.multiple_of(pl.program_id(0) * tile, tile)
    h_all = h_ref[...]
    h_rows = h_ref[pl.ds(start, tile), :]
    h2 = _gat_attention_rows(h_all, h_rows, adj_ref[...], m_ref[...],
                             a_s_ref[...], a_n_ref[...], alpha)
    z, q = _normalize_and_q(h2, c_ref[...], v)
    z_ref[...] = z
    q_ref[...] = q


def gat_encode_q_tiled(x, adj, m, params, *, alpha, v, budget, max_tile=None):
    n_pad, f_in = x.shape
    k = params["cluster"].shape[0]
    tile = _encoder_row_tile(n_pad, budget, max_tile)
    grid = (n_pad // tile,)
    cparams = pltpu.CompilerParams(dimension_semantics=("parallel",),
                                   vmem_limit_bytes=budget)
    row = lambda cols: pl.BlockSpec((tile, cols), lambda i: (i, 0))

    # K0: h1_raw = x @ W1
    h1_raw = pl.pallas_call(
        _xw_kernel, grid=grid,
        in_specs=[row(f_in), _resident_spec(params["w1"].shape)],
        out_specs=row(LANE),
        out_shape=jax.ShapeDtypeStruct((n_pad, LANE), jnp.float32),
        compiler_params=cparams,
    )(x, params["w1"])

    # K1: layer-1 attention/aggregation, fused with h2_raw = h1 @ W2
    h2_raw = pl.pallas_call(
        functools.partial(_gat_mid_tile_kernel, tile=tile, alpha=alpha),
        grid=grid,
        in_specs=[row(n_pad), row(n_pad),
                  _resident_spec((n_pad, LANE)),
                  _resident_spec(params["a_self1"].shape),
                  _resident_spec(params["a_neigh1"].shape),
                  _resident_spec(params["w2"].shape)],
        out_specs=row(LANE),
        out_shape=jax.ShapeDtypeStruct((n_pad, LANE), jnp.float32),
        compiler_params=cparams,
    )(adj, m, h1_raw, params["a_self1"], params["a_neigh1"], params["w2"])

    # K2: layer-2 attention/aggregation + l2-normalize + get_Q (row-local)
    z_pad, q_pad = pl.pallas_call(
        functools.partial(_gat_final_tile_kernel, tile=tile, alpha=alpha, v=v),
        grid=grid,
        in_specs=[row(n_pad), row(n_pad),
                  _resident_spec((n_pad, LANE)),
                  _resident_spec(params["a_self2"].shape),
                  _resident_spec(params["a_neigh2"].shape),
                  _resident_spec(params["cluster"].shape)],
        out_specs=(row(LANE), row(k)),
        out_shape=(jax.ShapeDtypeStruct((n_pad, LANE), jnp.float32),
                   jax.ShapeDtypeStruct((n_pad, k), jnp.float32)),
        compiler_params=cparams,
    )(adj, m, h2_raw, params["a_self2"], params["a_neigh2"], params["cluster"])
    return z_pad, q_pad


# ---------------------------------------------------------------------------
# Row-tiled dot-product decoder  A_pred = sigmoid(z @ z^T)  (bf16 output)
# ---------------------------------------------------------------------------
def _decode_kernel(z_ref, a_ref, *, tile):
    start = pl.multiple_of(pl.program_id(0) * tile, tile)
    z_rows = z_ref[pl.ds(start, tile), :].astype(jnp.bfloat16)
    logits = _contract_last(z_rows, z_ref[...].astype(jnp.bfloat16))  # (T, N) f32
    # sigmoid(x) = 0.5 * (tanh(x/2) + 1): one EUP op, output stays in [0, 1].
    a_ref[...] = (0.5 * (jnp.tanh(0.5 * logits) + 1.0)).astype(a_ref.dtype)


def dot_product_decode(z_pad, *, budget, max_tile=None):
    n_pad, e_pad = z_pad.shape
    tile = _decoder_row_tile(n_pad, budget, max_tile)
    return pl.pallas_call(
        functools.partial(_decode_kernel, tile=tile),
        grid=(n_pad // tile,),
        in_specs=[_resident_spec((n_pad, e_pad))],   # z passed ONCE, resident
        out_specs=pl.BlockSpec((tile, n_pad), lambda i: (i, 0)),
        out_shape=jax.ShapeDtypeStruct((n_pad, n_pad), A_PRED_DTYPE),
        compiler_params=pltpu.CompilerParams(
            dimension_semantics=("parallel",),      # megacore on v7x
            vmem_limit_bytes=budget),
    )(z_pad)


# ---------------------------------------------------------------------------
# DAEGC forward
# ---------------------------------------------------------------------------
def daegc_forward(params, x, adj, m, *, emb_size, alpha=LEAKY_ALPHA,
                  v=STUDENT_V, force_tiled=False, max_row_tile=None):
    n = x.shape[0]
    n_pad = _round_up(n, LANE)
    budget = _vmem_budget_bytes()

    # adj / M consumed in bf16 (0/1 adj exact; M perturbs the pre-softmax
    # logits at ~1e-2 relative).  Pass bf16 from the caller to avoid the cast.
    adj = adj if adj.dtype == jnp.bfloat16 else adj.astype(jnp.bfloat16)
    m = m if m.dtype == jnp.bfloat16 else m.astype(jnp.bfloat16)

    if n_pad != n:
        # Pad the node dim to a 128 multiple: lane-dense unmasked stores in the
        # decoder and clean tile divisibility.  Padded rows have an empty
        # adjacency row, so they never influence real rows.
        p = n_pad - n
        x = jnp.pad(x, ((0, p), (0, 0)))
        adj = jnp.pad(adj, ((0, p), (0, p)))
        m = jnp.pad(m, ((0, p), (0, p)))

    if force_tiled or not _fused_encoder_fits(n_pad, budget):
        z_pad, q_pad = gat_encode_q_tiled(x, adj, m, params, alpha=alpha, v=v,
                                          budget=budget, max_tile=max_row_tile)
    else:
        z_pad, q_pad = gat_encode_q_fused(x, adj, m, params, alpha=alpha, v=v,
                                          budget=budget)

    a_pred = dot_product_decode(z_pad, budget=budget, max_tile=max_row_tile)

    if n_pad != n:
        a_pred = a_pred[:n, :n]
        z_pad = z_pad[:n]
        q_pad = q_pad[:n]
    z = z_pad[:, :emb_size]                      # drop lane padding
    return a_pred, z, q_pad


# ---------------------------------------------------------------------------
# Deterministic parameter init (replaces the torch.load of the pretrained GAT)
# ---------------------------------------------------------------------------
def _xavier_uniform(key, shape, gain=1.414):
    fan_in, fan_out = shape
    bound = gain * jnp.sqrt(6.0 / (fan_in + fan_out))
    return jax.random.uniform(key, shape, jnp.float32, minval=-bound, maxval=bound)


def _xavier_normal(key, shape):
    fan_in, fan_out = shape
    std = jnp.sqrt(2.0 / (fan_in + fan_out))
    return std * jax.random.normal(key, shape, jnp.float32)


def _pad_cols(a, cols):
    return jnp.pad(a, ((0, 0), (0, cols - a.shape[1])))


def _pad_rows_cols(a, rows, cols):
    return jnp.pad(a, ((0, rows - a.shape[0]), (0, cols - a.shape[1])))


def make_params(key, f_in, hid, emb, k):
    ks = jax.random.split(key, 7)
    w1 = _xavier_uniform(ks[0], (f_in, hid))
    a_self1 = _xavier_uniform(ks[1], (1, hid))
    a_neigh1 = _xavier_uniform(ks[2], (1, hid))
    w2 = _xavier_uniform(ks[3], (hid, emb))
    a_self2 = _xavier_uniform(ks[4], (1, emb))
    a_neigh2 = _xavier_uniform(ks[5], (1, emb))
    cluster = _xavier_normal(ks[6], (k, emb))
    # Zero-pad every feature dim to the 128-lane vreg width (exact: padded
    # columns of W/a/cluster are zero so padded h/z columns stay zero).
    return {
        "w1": _pad_cols(w1, LANE),
        "a_self1": _pad_cols(a_self1, LANE),
        "a_neigh1": _pad_cols(a_neigh1, LANE),
        "w2": _pad_rows_cols(w2, LANE, LANE),
        "a_self2": _pad_cols(a_self2, LANE),
        "a_neigh2": _pad_cols(a_neigh2, LANE),
        "cluster": _pad_cols(cluster, LANE),
    }


def make_graph(key, n, f_in):
    kx, ka = jax.random.split(key)
    x = jax.random.normal(kx, (n, f_in), jnp.float32)
    rnd = jax.random.uniform(ka, (n, n))
    adj = (rnd > 0.8).astype(jnp.float32)
    adj = jnp.minimum(jnp.maximum(adj, adj.T) + jnp.eye(n, dtype=jnp.float32), 1.0)
    m = adj / jnp.sum(adj, axis=1, keepdims=True)   # row-normalized proximity
    return x, adj.astype(jnp.bfloat16), m.astype(jnp.bfloat16)


if __name__ == "__main__":
    F_IN, HID, EMB, K = 32, 32, 16, 4
    key = jax.random.PRNGKey(0)
    k_params, k_graph_a, k_graph_b = jax.random.split(key, 3)
    params = make_params(k_params, F_IN, HID, EMB, K)

    # ---- Test A: small graph (N = 64) -> fused encoder path ----------------
    N_A = 64
    x_a, adj_a, m_a = make_graph(k_graph_a, N_A, F_IN)
    fwd = jax.jit(functools.partial(daegc_forward, emb_size=EMB))
    a_pred, z, q = fwd(params, x_a, adj_a, m_a)
    jax.block_until_ready((a_pred, z, q))

    assert a_pred.shape == (N_A, N_A) and z.shape == (N_A, EMB) and q.shape == (N_A, K)
    assert a_pred.dtype == A_PRED_DTYPE
    assert bool(jnp.all(jnp.isfinite(a_pred.astype(jnp.float32))))
    assert bool(jnp.all(jnp.isfinite(z))) and bool(jnp.all(jnp.isfinite(q)))
    assert bool(jnp.allclose(jnp.sum(q, axis=1), 1.0, atol=1e-5))

    # ---- Test B: N = 200 -> exercises row padding (200 -> 256), multi-tile
    #      grids (max_row_tile=128) and the row-tiled encoder path; results
    #      must agree with the fused path. ------------------------------------
    N_B = 200
    x_b, adj_b, m_b = make_graph(k_graph_b, N_B, F_IN)
    fwd_b = jax.jit(functools.partial(daegc_forward, emb_size=EMB,
                                      max_row_tile=128))
    fwd_b_tiled = jax.jit(functools.partial(daegc_forward, emb_size=EMB,
                                            force_tiled=True, max_row_tile=128))
    a1, z1, q1 = fwd_b(params, x_b, adj_b, m_b)
    a2, z2, q2 = fwd_b_tiled(params, x_b, adj_b, m_b)
    jax.block_until_ready((a1, z1, q1, a2, z2, q2))

    assert a2.shape == (N_B, N_B) and z2.shape == (N_B, EMB) and q2.shape == (N_B, K)
    assert bool(jnp.all(jnp.isfinite(z2))) and bool(jnp.all(jnp.isfinite(q2)))
    assert bool(jnp.allclose(jnp.sum(q2, axis=1), 1.0, atol=1e-5))
    assert bool(jnp.allclose(z1, z2, atol=1e-3))
    assert bool(jnp.allclose(q1, q2, atol=1e-3))
    assert bool(jnp.allclose(a1.astype(jnp.float32), a2.astype(jnp.float32),
                             atol=2e-2))

    print("KERNEL_OK")
</pallas_src>

<mosaic_0001>
module attributes {stable_mosaic.version = 11 : i64} {
  func.func @_daegc_fused_encode_kernel(%arg0: i32, %arg1: memref<128x32xf32, #tpu.memory_space<vmem>>, %arg2: memref<128x128xbf16, #tpu.memory_space<vmem>>, %arg3: memref<128x128xbf16, #tpu.memory_space<vmem>>, %arg4: memref<32x128xf32, #tpu.memory_space<vmem>>, %arg5: memref<1x128xf32, #tpu.memory_space<vmem>>, %arg6: memref<1x128xf32, #tpu.memory_space<vmem>>, %arg7: memref<128x128xf32, #tpu.memory_space<vmem>>, %arg8: memref<1x128xf32, #tpu.memory_space<vmem>>, %arg9: memref<1x128xf32, #tpu.memory_space<vmem>>, %arg10: memref<4x128xf32, #tpu.memory_space<vmem>>, %arg11: memref<128x128xf32, #tpu.memory_space<vmem>>, %arg12: memref<128x4xf32, #tpu.memory_space<vmem>>) attributes {dimension_semantics = [#tpu.dimension_semantics<arbitrary>], iteration_bounds = array<i64: 1>, scalar_prefetch = 0 : i64, scratch_operands = 0 : i64, tpu.core_type = #tpu.core_type<tc>, window_params = [{pipeline_mode = #tpu.pipeline_mode<synchronous>, transform_indices = @transform_0, window_bounds = array<i64: 128, 32>}, {pipeline_mode = #tpu.pipeline_mode<synchronous>, transform_indices = @transform_1, window_bounds = array<i64: 128, 128>}, {pipeline_mode = #tpu.pipeline_mode<synchronous>, transform_indices = @transform_2, window_bounds = array<i64: 128, 128>}, {pipeline_mode = #tpu.pipeline_mode<synchronous>, transform_indices = @transform_3, window_bounds = array<i64: 32, 128>}, {pipeline_mode = #tpu.pipeline_mode<synchronous>, transform_indices = @transform_4, window_bounds = array<i64: 1, 128>}, {pipeline_mode = #tpu.pipeline_mode<synchronous>, transform_indices = @transform_5, window_bounds = array<i64: 1, 128>}, {pipeline_mode = #tpu.pipeline_mode<synchronous>, transform_indices = @transform_6, window_bounds = array<i64: 128, 128>}, {pipeline_mode = #tpu.pipeline_mode<synchronous>, transform_indices = @transform_7, window_bounds = array<i64: 1, 128>}, {pipeline_mode = #tpu.pipeline_mode<synchronous>, transform_indices = @transform_8, window_bounds = array<i64: 1, 128>}, {pipeline_mode = #tpu.pipeline_mode<synchronous>, transform_indices = @transform_9, window_bounds = array<i64: 4, 128>}, {pipeline_mode = #tpu.pipeline_mode<synchronous>, transform_indices = @transform_10, window_bounds = array<i64: 128, 128>}, {pipeline_mode = #tpu.pipeline_mode<synchronous>, transform_indices = @transform_11, window_bounds = array<i64: 128, 4>}]} {
    %c0 = arith.constant 0 : index
    %c0_0 = arith.constant 0 : index
    %0 = vector.load %arg2[%c0, %c0_0] : memref<128x128xbf16, #tpu.memory_space<vmem>>, vector<128x128xbf16>
    %c0_1 = arith.constant 0 : index
    %c0_2 = arith.constant 0 : index
    %1 = vector.load %arg3[%c0_1, %c0_2] : memref<128x128xbf16, #tpu.memory_space<vmem>>, vector<128x128xbf16>
    %2 = arith.extf %1 : vector<128x128xbf16> to vector<128x128xf32>
    %c0_3 = arith.constant 0 : index
    %c0_4 = arith.constant 0 : index
    %3 = vector.load %arg1[%c0_3, %c0_4] : memref<128x32xf32, #tpu.memory_space<vmem>>, vector<128x32xf32>
    %4 = arith.truncf %3 : vector<128x32xf32> to vector<128x32xbf16>
    %c0_5 = arith.constant 0 : index
    %c0_6 = arith.constant 0 : index
    %5 = vector.load %arg4[%c0_5, %c0_6] : memref<32x128xf32, #tpu.memory_space<vmem>>, vector<32x128xf32>
    %6 = arith.truncf %5 : vector<32x128xf32> to vector<32x128xbf16>
    %cst = arith.constant dense<0.000000e+00> : vector<128x128xf32>
    %7 = tpu.matmul %4, %6, %cst {dimension_numbers = #tpu.dot_dimension_numbers<[1], [0], [0], [1], [0, 0, 1, 1], [], []>} : vector<128x32xbf16>, vector<32x128xbf16>, vector<128x128xf32> -> vector<128x128xf32>
    %c0_7 = arith.constant 0 : index
    %c0_8 = arith.constant 0 : index
    %8 = vector.load %arg5[%c0_7, %c0_8] : memref<1x128xf32, #tpu.memory_space<vmem>>, vector<1x128xf32>
    %c0_9 = arith.constant 0 : index
    %c0_10 = arith.constant 0 : index
    %9 = vector.load %arg6[%c0_9, %c0_10] : memref<1x128xf32, #tpu.memory_space<vmem>>, vector<1x128xf32>
    %10 = vector.broadcast %8 : vector<1x128xf32> to vector<128x128xf32>
    %11 = arith.mulf %7, %10 : vector<128x128xf32>
    %cst_11 = arith.constant dense<0.000000e+00> : vector<128xf32>
    %12 = vector.multi_reduction <add>, %11, %cst_11 [1] : vector<128x128xf32> to vector<128xf32>
    %13 = vector.shape_cast %12 : vector<128xf32> to vector<128x1xf32>
    %cst_12 = arith.constant dense<0.000000e+00> : vector<1x128xf32>
    %14 = tpu.matmul %9, %7, %cst_12 {dimension_numbers = #tpu.dot_dimension_numbers<[1], [1], [0], [0], [0, 0, 1, 0], [], []>} : vector<1x128xf32>, vector<128x128xf32>, vector<1x128xf32> -> vector<1x128xf32>
    %15 = vector.broadcast %13 : vector<128x1xf32> to vector<128x128xf32>
    %16 = vector.broadcast %14 : vector<1x128xf32> to vector<128x128xf32>
    %17 = arith.addf %15, %16 : vector<128x128xf32>
    %18 = arith.mulf %17, %2 : vector<128x128xf32>
    %cst_13 = arith.constant 0.000000e+00 : f32
    %19 = vector.broadcast %cst_13 : f32 to vector<128x128xf32>
    %20 = arith.cmpf ogt, %18, %19 : vector<128x128xf32>
    %cst_14 = arith.constant 2.000000e-01 : f32
    %21 = vector.broadcast %cst_14 : f32 to vector<128x128xf32>
    %22 = arith.mulf %21, %18 : vector<128x128xf32>
    %23 = arith.select %20, %18, %22 : vector<128x128xi1>, vector<128x128xf32>
    %cst_15 = arith.constant 0.000000e+00 : bf16
    %24 = vector.broadcast %cst_15 : bf16 to vector<128x128xbf16>
    %25 = arith.cmpf ogt, %0, %24 : vector<128x128xbf16>
    %cst_16 = arith.constant -9.000000e+15 : f32
    %26 = vector.broadcast %cst_16 : f32 to vector<128x128xf32>
    %27 = arith.select %25, %23, %26 : vector<128x128xi1>, vector<128x128xf32>
    %cst_17 = arith.constant dense<0xFF800000> : vector<128xf32>
    %28 = vector.multi_reduction <maximumf>, %27, %cst_17 [1] : vector<128x128xf32> to vector<128xf32>
    %29 = vector.shape_cast %28 : vector<128xf32> to vector<128x1xf32>
    %30 = vector.broadcast %29 : vector<128x1xf32> to vector<128x128xf32>
    %31 = arith.subf %27, %30 : vector<128x128xf32>
    %32 = math.exp %31 : vector<128x128xf32>
    %cst_18 = arith.constant dense<0.000000e+00> : vector<128xf32>
    %33 = vector.multi_reduction <add>, %32, %cst_18 [1] : vector<128x128xf32> to vector<128xf32>
    %34 = vector.shape_cast %33 : vector<128xf32> to vector<128x1xf32>
    %35 = tpu.reciprocal %34 {approx = true} : vector<128x1xf32> -> vector<128x1xf32>
    %36 = vector.broadcast %35 : vector<128x1xf32> to vector<128x128xf32>
    %37 = arith.mulf %32, %36 : vector<128x128xf32>
    %38 = arith.truncf %37 : vector<128x128xf32> to vector<128x128xbf16>
    %39 = arith.truncf %7 : vector<128x128xf32> to vector<128x128xbf16>
    %cst_19 = arith.constant dense<0.000000e+00> : vector<128x128xf32>
    %40 = tpu.matmul %38, %39, %cst_19 {dimension_numbers = #tpu.dot_dimension_numbers<[1], [0], [0], [1], [0, 0, 1, 1], [], []>} : vector<128x128xbf16>, vector<128x128xbf16>, vector<128x128xf32> -> vector<128x128xf32>
    %cst_20 = arith.constant 0.000000e+00 : f32
    %41 = vector.broadcast %cst_20 : f32 to vector<128x128xf32>
    %42 = arith.cmpf ogt, %40, %41 : vector<128x128xf32>
    %cst_21 = arith.constant 0.000000e+00 : f32
    %43 = vector.broadcast %cst_21 : f32 to vector<128x128xf32>
    %44 = arith.minimumf %40, %43 : vector<128x128xf32>
    %45 = math.exp %44 : vector<128x128xf32>
    %cst_22 = arith.constant 1.000000e+00 : f32
    %46 = vector.broadcast %cst_22 : f32 to vector<128x128xf32>
    %47 = arith.subf %45, %46 : vector<128x128xf32>
    %48 = arith.select %42, %40, %47 : vector<128x128xi1>, vector<128x128xf32>
    %49 = arith.truncf %48 : vector<128x128xf32> to vector<128x128xbf16>
    %c0_23 = arith.constant 0 : index
    %c0_24 = arith.constant 0 : index
    %50 = vector.load %arg7[%c0_23, %c0_24] : memref<128x128xf32, #tpu.memory_space<vmem>>, vector<128x128xf32>
    %51 = arith.truncf %50 : vector<128x128xf32> to vector<128x128xbf16>
    %cst_25 = arith.constant dense<0.000000e+00> : vector<128x128xf32>
    %52 = tpu.matmul %49, %51, %cst_25 {dimension_numbers = #tpu.dot_dimension_numbers<[1], [0], [0], [1], [0, 0, 1, 1], [], []>} : vector<128x128xbf16>, vector<128x128xbf16>, vector<128x128xf32> -> vector<128x128xf32>
    %c0_26 = arith.constant 0 : index
    %c0_27 = arith.constant 0 : index
    %53 = vector.load %arg8[%c0_26, %c0_27] : memref<1x128xf32, #tpu.memory_space<vmem>>, vector<1x128xf32>
    %c0_28 = arith.constant 0 : index
    %c0_29 = arith.constant 0 : index
    %54 = vector.load %arg9[%c0_28, %c0_29] : memref<1x128xf32, #tpu.memory_space<vmem>>, vector<1x128xf32>
    %55 = vector.broadcast %53 : vector<1x128xf32> to vector<128x128xf32>
    %56 = arith.mulf %52, %55 : vector<128x128xf32>
    %cst_30 = arith.constant dense<0.000000e+00> : vector<128xf32>
    %57 = vector.multi_reduction <add>, %56, %cst_30 [1] : vector<128x128xf32> to vector<128xf32>
    %58 = vector.shape_cast %57 : vector<128xf32> to vector<128x1xf32>
    %cst_31 = arith.constant dense<0.000000e+00> : vector<1x128xf32>
    %59 = tpu.matmul %54, %52, %cst_31 {dimension_numbers = #tpu.dot_dimension_numbers<[1], [1], [0], [0], [0, 0, 1, 0], [], []>} : vector<1x128xf32>, vector<128x128xf32>, vector<1x128xf32> -> vector<1x128xf32>
    %60 = vector.broadcast %58 : vector<128x1xf32> to vector<128x128xf32>
    %61 = vector.broadcast %59 : vector<1x128xf32> to vector<128x128xf32>
    %62 = arith.addf %60, %61 : vector<128x128xf32>
    %63 = arith.mulf %62, %2 : vector<128x128xf32>
    %cst_32 = arith.constant 0.000000e+00 : f32
    %64 = vector.broadcast %cst_32 : f32 to vector<128x128xf32>
    %65 = arith.cmpf ogt, %63, %64 : vector<128x128xf32>
    %cst_33 = arith.constant 2.000000e-01 : f32
    %66 = vector.broadcast %cst_33 : f32 to vector<128x128xf32>
    %67 = arith.mulf %66, %63 : vector<128x128xf32>
    %68 = arith.select %65, %63, %67 : vector<128x128xi1>, vector<128x128xf32>
    %cst_34 = arith.constant 0.000000e+00 : bf16
    %69 = vector.broadcast %cst_34 : bf16 to vector<128x128xbf16>
    %70 = arith.cmpf ogt, %0, %69 : vector<128x128xbf16>
    %cst_35 = arith.constant -9.000000e+15 : f32
    %71 = vector.broadcast %cst_35 : f32 to vector<128x128xf32>
    %72 = arith.select %70, %68, %71 : vector<128x128xi1>, vector<128x128xf32>
    %cst_36 = arith.constant dense<0xFF800000> : vector<128xf32>
    %73 = vector.multi_reduction <maximumf>, %72, %cst_36 [1] : vector<128x128xf32> to vector<128xf32>
    %74 = vector.shape_cast %73 : vector<128xf32> to vector<128x1xf32>
    %75 = vector.broadcast %74 : vector<128x1xf32> to vector<128x128xf32>
    %76 = arith.subf %72, %75 : vector<128x128xf32>
    %77 = math.exp %76 : vector<128x128xf32>
    %cst_37 = arith.constant dense<0.000000e+00> : vector<128xf32>
    %78 = vector.multi_reduction <add>, %77, %cst_37 [1] : vector<128x128xf32> to vector<128xf32>
    %79 = vector.shape_cast %78 : vector<128xf32> to vector<128x1xf32>
    %80 = tpu.reciprocal %79 {approx = true} : vector<128x1xf32> -> vector<128x1xf32>
    %81 = vector.broadcast %80 : vector<128x1xf32> to vector<128x128xf32>
    %82 = arith.mulf %77, %81 : vector<128x128xf32>
    %83 = arith.truncf %82 : vector<128x128xf32> to vector<128x128xbf16>
    %84 = arith.truncf %52 : vector<128x128xf32> to vector<128x128xbf16>
    %cst_38 = arith.constant dense<0.000000e+00> : vector<128x128xf32>
    %85 = tpu.matmul %83, %84, %cst_38 {dimension_numbers = #tpu.dot_dimension_numbers<[1], [0], [0], [1], [0, 0, 1, 1], [], []>} : vector<128x128xbf16>, vector<128x128xbf16>, vector<128x128xf32> -> vector<128x128xf32>
    %cst_39 = arith.constant 0.000000e+00 : f32
    %86 = vector.broadcast %cst_39 : f32 to vector<128x128xf32>
    %87 = arith.cmpf ogt, %85, %86 : vector<128x128xf32>
    %cst_40 = arith.constant 0.000000e+00 : f32
    %88 = vector.broadcast %cst_40 : f32 to vector<128x128xf32>
    %89 = arith.minimumf %85, %88 : vector<128x128xf32>
    %90 = math.exp %89 : vector<128x128xf32>
    %cst_41 = arith.constant 1.000000e+00 : f32
    %91 = vector.broadcast %cst_41 : f32 to vector<128x128xf32>
    %92 = arith.subf %90, %91 : vector<128x128xf32>
    %93 = arith.select %87, %85, %92 : vector<128x128xi1>, vector<128x128xf32>
    %c0_42 = arith.constant 0 : index
    %c0_43 = arith.constant 0 : index
    %94 = vector.load %arg10[%c0_42, %c0_43] : memref<4x128xf32, #tpu.memory_space<vmem>>, vector<4x128xf32>
    %95 = arith.mulf %93, %93 : vector<128x128xf32>
    %cst_44 = arith.constant dense<0.000000e+00> : vector<128xf32>
    %96 = vector.multi_reduction <add>, %95, %cst_44 [1] : vector<128x128xf32> to vector<128xf32>
    %97 = vector.shape_cast %96 : vector<128xf32> to vector<128x1xf32>
    %cst_45 = arith.constant 1.000000e-24 : f32
    %98 = vector.broadcast %cst_45 : f32 to vector<128x1xf32>
    %99 = arith.maximumf %97, %98 : vector<128x1xf32>
    %100 = math.rsqrt %99 : vector<128x1xf32>
    %101 = vector.broadcast %100 : vector<128x1xf32> to vector<128x128xf32>
    %102 = arith.mulf %93, %101 : vector<128x128xf32>
    %103 = arith.mulf %94, %94 : vector<4x128xf32>
    %cst_46 = arith.constant dense<0.000000e+00> : vector<4xf32>
    %104 = vector.multi_reduction <add>, %103, %cst_46 [1] : vector<4x128xf32> to vector<4xf32>
    %105 = vector.shape_cast %104 : vector<4xf32> to vector<1x4xf32>
    %cst_47 = arith.constant dense<0.000000e+00> : vector<128x4xf32>
    %106 = tpu.matmul %102, %94, %cst_47 {dimension_numbers = #tpu.dot_dimension_numbers<[1], [1], [0], [0], [0, 0, 1, 0], [], []>} : vector<128x128xf32>, vector<4x128xf32>, vector<128x4xf32> -> vector<128x4xf32>
    %cst_48 = arith.constant 2.000000e+00 : f32
    %107 = vector.broadcast %cst_48 : f32 to vector<128x4xf32>
    %108 = arith.mulf %107, %106 : vector<128x4xf32>
    %cst_49 = arith.constant 1.000000e+00 : f32
    %109 = vector.broadcast %cst_49 : f32 to vector<128x4xf32>
    %110 = arith.subf %109, %108 : vector<128x4xf32>
    %111 = vector.broadcast %105 : vector<1x4xf32> to vector<128x4xf32>
    %112 = arith.addf %110, %111 : vector<128x4xf32>
    %cst_50 = arith.constant 0.000000e+00 : f32
    %113 = vector.broadcast %cst_50 : f32 to vector<128x4xf32>
    %114 = arith.maximumf %112, %113 : vector<128x4xf32>
    %cst_51 = arith.constant 1.000000e+00 : f32
    %115 = vector.broadcast %cst_51 : f32 to vector<128x4xf32>
    %116 = arith.divf %114, %115 : vector<128x4xf32>
    %cst_52 = arith.constant 1.000000e+00 : f32
    %117 = vector.broadcast %cst_52 : f32 to vector<128x4xf32>
    %118 = arith.addf %117, %116 : vector<128x4xf32>
    %cst_53 = arith.constant 1.000000e+00 : f32
    %119 = vector.broadcast %cst_53 : f32 to vector<128x4xf32>
    %120 = arith.divf %119, %118 : vector<128x4xf32>
    %cst_54 = arith.constant dense<0.000000e+00> : vector<128xf32>
    %121 = vector.multi_reduction <add>, %120, %cst_54 [1] : vector<128x4xf32> to vector<128xf32>
    %122 = vector.shape_cast %121 : vector<128xf32> to vector<128x1xf32>
    %123 = vector.broadcast %122 : vector<128x1xf32> to vector<128x4xf32>
    %124 = arith.divf %120, %123 : vector<128x4xf32>
    %c0_55 = arith.constant 0 : index
    %c0_56 = arith.constant 0 : index
    %125 = vector.load %arg11[%c0_55, %c0_56] : memref<128x128xf32, #tpu.memory_space<vmem>>, vector<128x128xf32>
    tpu.vector_store %arg11[%c0_55, %c0_56], %102 {strides = array<i32>} : memref<128x128xf32, #tpu.memory_space<vmem>>, vector<128x128xf32>,
    %c0_57 = arith.constant 0 : index
    %c0_58 = arith.constant 0 : index
    %126 = vector.load %arg12[%c0_57, %c0_58] : memref<128x4xf32, #tpu.memory_space<vmem>>, vector<128x4xf32>
    tpu.vector_store %arg12[%c0_57, %c0_58], %124 {strides = array<i32>} : memref<128x4xf32, #tpu.memory_space<vmem>>, vector<128x4xf32>,
    return
  }
  func.func @transform_0(%arg0: i32) -> (i32, i32) {
    %c0_i32 = arith.constant 0 : i32
    %c0_i32_0 = arith.constant 0 : i32
    %c0_i32_1 = arith.constant 0 : i32
    return %c0_i32, %c0_i32_0 : i32, i32
  }
  func.func @transform_1(%arg0: i32) -> (i32, i32) {
    %c0_i32 = arith.constant 0 : i32
    %c0_i32_0 = arith.constant 0 : i32
    %c0_i32_1 = arith.constant 0 : i32
    return %c0_i32, %c0_i32_0 : i32, i32
  }
  func.func @transform_2(%arg0: i32) -> (i32, i32) {
    %c0_i32 = arith.constant 0 : i32
    %c0_i32_0 = arith.constant 0 : i32
    %c0_i32_1 = arith.constant 0 : i32
    return %c0_i32, %c0_i32_0 : i32, i32
  }
  func.func @transform_3(%arg0: i32) -> (i32, i32) {
    %c0_i32 = arith.constant 0 : i32
    %c0_i32_0 = arith.constant 0 : i32
    %c0_i32_1 = arith.constant 0 : i32
    return %c0_i32, %c0_i32_0 : i32, i32
  }
  func.func @transform_4(%arg0: i32) -> (i32, i32) {
    %c0_i32 = arith.constant 0 : i32
    %c0_i32_0 = arith.constant 0 : i32
    %c0_i32_1 = arith.constant 0 : i32
    return %c0_i32, %c0_i32_0 : i32, i32
  }
  func.func @transform_5(%arg0: i32) -> (i32, i32) {
    %c0_i32 = arith.constant 0 : i32
    %c0_i32_0 = arith.constant 0 : i32
    %c0_i32_1 = arith.constant 0 : i32
    return %c0_i32, %c0_i32_0 : i32, i32
  }
  func.func @transform_6(%arg0: i32) -> (i32, i32) {
    %c0_i32 = arith.constant 0 : i32
    %c0_i32_0 = arith.constant 0 : i32
    %c0_i32_1 = arith.constant 0 : i32
    return %c0_i32, %c0_i32_0 : i32, i32
  }
  func.func @transform_7(%arg0: i32) -> (i32, i32) {
    %c0_i32 = arith.constant 0 : i32
    %c0_i32_0 = arith.constant 0 : i32
    %c0_i32_1 = arith.constant 0 : i32
    return %c0_i32, %c0_i32_0 : i32, i32
  }
  func.func @transform_8(%arg0: i32) -> (i32, i32) {
    %c0_i32 = arith.constant 0 : i32
    %c0_i32_0 = arith.constant 0 : i32
    %c0_i32_1 = arith.constant 0 : i32
    return %c0_i32, %c0_i32_0 : i32, i32
  }
  func.func @transform_9(%arg0: i32) -> (i32, i32) {
    %c0_i32 = arith.constant 0 : i32
    %c0_i32_0 = arith.constant 0 : i32
    %c0_i32_1 = arith.constant 0 : i32
    return %c0_i32, %c0_i32_0 : i32, i32
  }
  func.func @transform_10(%arg0: i32) -> (i32, i32) {
    %c0_i32 = arith.constant 0 : i32
    %c0_i32_0 = arith.constant 0 : i32
    %c0_i32_1 = arith.constant 0 : i32
    return %c0_i32, %c0_i32_0 : i32, i32
  }
  func.func @transform_11(%arg0: i32) -> (i32, i32) {
    %c0_i32 = arith.constant 0 : i32
    %c0_i32_0 = arith.constant 0 : i32
    %c0_i32_1 = arith.constant 0 : i32
    return %c0_i32, %c0_i32_0 : i32, i32
  }
}

module attributes {stable_mosaic.version = 11 : i64} {
  func.func @_decode_kernel(%arg0: i32, %arg1: memref<128x128xf32, #tpu.memory_space<vmem>>, %arg2: memref<128x128xbf16, #tpu.memory_space<vmem>>) attributes {dimension_semantics = [#tpu.dimension_semantics<parallel>], iteration_bounds = array<i64: 1>, scalar_prefetch = 0 : i64, scratch_operands = 0 : i64, tpu.core_type = #tpu.core_type<tc>, window_params = [{pipeline_mode = #tpu.pipeline_mode<synchronous>, transform_indices = @transform_0, window_bounds = array<i64: 128, 128>}, {transform_indices = @transform_1, window_bounds = array<i64: 128, 128>}]} {
    %c128_i32 = arith.constant 128 : i32
    %0 = arith.muli %arg0, %c128_i32 : i32
    %1 = tpu.assume_multiple %0, 128 : i32
    %2 = arith.index_cast %1 : i32 to index
    %c0 = arith.constant 0 : index
    %3 = vector.load %arg1[%2, %c0] : memref<128x128xf32, #tpu.memory_space<vmem>>, vector<128x128xf32>
    %4 = arith.truncf %3 : vector<128x128xf32> to vector<128x128xbf16>
    %c0_0 = arith.constant 0 : index
    %c0_1 = arith.constant 0 : index
    %5 = vector.load %arg1[%c0_0, %c0_1] : memref<128x128xf32, #tpu.memory_space<vmem>>, vector<128x128xf32>
    %6 = arith.truncf %5 : vector<128x128xf32> to vector<128x128xbf16>
    %cst = arith.constant dense<0.000000e+00> : vector<128x128xf32>
    %7 = tpu.matmul %4, %6, %cst {dimension_numbers = #tpu.dot_dimension_numbers<[1], [1], [0], [0], [0, 0, 1, 0], [], []>} : vector<128x128xbf16>, vector<128x128xbf16>, vector<128x128xf32> -> vector<128x128xf32>
    %cst_2 = arith.constant 5.000000e-01 : f32
    %8 = vector.broadcast %cst_2 : f32 to vector<128x128xf32>
    %9 = arith.mulf %8, %7 : vector<128x128xf32>
    %10 = math.tanh %9 : vector<128x128xf32>
    %cst_3 = arith.constant 1.000000e+00 : f32
    %11 = vector.broadcast %cst_3 : f32 to vector<128x128xf32>
    %12 = arith.addf %10, %11 : vector<128x128xf32>
    %cst_4 = arith.constant 5.000000e-01 : f32
    %13 = vector.broadcast %cst_4 : f32 to vector<128x128xf32>
    %14 = arith.mulf %13, %12 : vector<128x128xf32>
    %15 = arith.truncf %14 : vector<128x128xf32> to vector<128x128xbf16>
    %c0_5 = arith.constant 0 : index
    %c0_6 = arith.constant 0 : index
    %16 = vector.load %arg2[%c0_5, %c0_6] : memref<128x128xbf16, #tpu.memory_space<vmem>>, vector<128x128xbf16>
    tpu.vector_store %arg2[%c0_5, %c0_6], %15 {strides = array<i32>} : memref<128x128xbf16, #tpu.memory_space<vmem>>, vector<128x128xbf16>,
    return
  }
  func.func @transform_0(%arg0: i32) -> (i32, i32) {
    %c0_i32 = arith.constant 0 : i32
    %c0_i32_0 = arith.constant 0 : i32
    %c0_i32_1 = arith.constant 0 : i32
    return %c0_i32, %c0_i32_0 : i32, i32
  }
  func.func @transform_1(%arg0: i32) -> (i32, i32) {
    %c0_i32 = arith.constant 0 : i32
    %c0_i32_0 = arith.constant 0 : i32
    return %arg0, %c0_i32 : i32, i32
  }
}

</mosaic_0001>

<llo_original>
// kernel: daegc_forward.3
$region0: #{daegc_forward.3}
  #allocation0 [shape = 'u32[]', space=smem, size = 0x4, offset = 0x4, fixed_abs, tag = 'smem constant byte address 0x4 - core index']
  #allocation1 [shape = 'u32[144,128]{1,0:T(1,128)}', space=vmem, size = 0x12000, scoped, tag = 'internal scratch']
  %s0 = inlined_call_operand.vmem [shape: f32[128,128], index: 0, kind: input, shape index: {}]
  %s1 = inlined_call_operand.vmem [shape: bf16[128,128], index: 1, kind: output, shape index: {}]
  %s2 = sld [smem:[#allocation0]]
  $region14: #{daegc_forward.3} parent=0
    _
  %s4 = ssub.s32 1, %s2
  %s5 = scalar_select 0, %s4, %s2
  // Predicated region
  $region2: #{daegc_forward.3} parent=0 // pred_check
    _
  $region3: #{daegc_forward.3} parent=0 // pred_check_branch
    %7 = sbr.rel (0) target = $region5
  $region4: #{daegc_forward.3} parent=0 // pred_region
    _
  $region5: #{daegc_forward.3} parent=0 // pred_fallthru
    _
  %s9 = smul.u32 0, 128
  %s10 = scalar_lea.vmem %s0, %s9
  %v11 = vld [vmem:[%s10] sm:$0xff]
  %v12 = vld [vmem:[%s10 + $0x8] sm:$0xff]
  %v13 = vld [vmem:[%s10 + $0x10] sm:$0xff]
  %v14 = vld [vmem:[%s10 + $0x18] sm:$0xff]
  %v15 = vld [vmem:[%s10 + $0x20] sm:$0xff]
  %v16 = vld [vmem:[%s10 + $0x28] sm:$0xff]
  %v17 = vld [vmem:[%s10 + $0x30] sm:$0xff]
  %v18 = vld [vmem:[%s10 + $0x38] sm:$0xff]
  %v19 = vld [vmem:[%s10 + $0x40] sm:$0xff]
  %v20 = vld [vmem:[%s10 + $0x48] sm:$0xff]
  %v21 = vld [vmem:[%s10 + $0x50] sm:$0xff]
  %v22 = vld [vmem:[%s10 + $0x58] sm:$0xff]
  %v23 = vld [vmem:[%s10 + $0x60] sm:$0xff]
  %v24 = vld [vmem:[%s10 + $0x68] sm:$0xff]
  %v25 = vld [vmem:[%s10 + $0x70] sm:$0xff]
  %v26 = vld [vmem:[%s10 + $0x78] sm:$0xff]
  %v27 = vpack.c.bf16 %v12, %v11
  %v28 = vpack.c.bf16 %v14, %v13
  %v29 = vpack.c.bf16 %v16, %v15
  %v30 = vpack.c.bf16 %v18, %v17
  %v31 = vpack.c.bf16 %v20, %v19
  %v32 = vpack.c.bf16 %v22, %v21
  %v33 = vpack.c.bf16 %v24, %v23
  %v34 = vpack.c.bf16 %v26, %v25
  %v35 = vld [vmem:[%s0] sm:$0xff]
  %v36 = vld [vmem:[%s0 + $0x8] sm:$0xff]
  %v37 = vld [vmem:[%s0 + $0x10] sm:$0xff]
  %v38 = vld [vmem:[%s0 + $0x18] sm:$0xff]
  %v39 = vld [vmem:[%s0 + $0x20] sm:$0xff]
  %v40 = vld [vmem:[%s0 + $0x28] sm:$0xff]
  %v41 = vld [vmem:[%s0 + $0x30] sm:$0xff]
  %v42 = vld [vmem:[%s0 + $0x38] sm:$0xff]
  %v43 = vld [vmem:[%s0 + $0x40] sm:$0xff]
  %v44 = vld [vmem:[%s0 + $0x48] sm:$0xff]
  %v45 = vld [vmem:[%s0 + $0x50] sm:$0xff]
  %v46 = vld [vmem:[%s0 + $0x58] sm:$0xff]
  %v47 = vld [vmem:[%s0 + $0x60] sm:$0xff]
  %v48 = vld [vmem:[%s0 + $0x68] sm:$0xff]
  %v49 = vld [vmem:[%s0 + $0x70] sm:$0xff]
  %v50 = vld [vmem:[%s0 + $0x78] sm:$0xff]
  %v51 = vpack.c.bf16 %v36, %v35
  %v52 = vpack.c.bf16 %v38, %v37
  %v53 = vpack.c.bf16 %v40, %v39
  %v54 = vpack.c.bf16 %v42, %v41
  %v55 = vpack.c.bf16 %v44, %v43
  %v56 = vpack.c.bf16 %v46, %v45
  %v57 = vpack.c.bf16 %v48, %v47
  %v58 = vpack.c.bf16 %v50, %v49
  %59 = vmatprep.subr.bf16.mxu0 0
  %60 = vmatpush1.bf16.xpose.msra.mxu0 %v51
  %61 = vmatprep.subr.bf16.mxu0 0
  %62 = vmatpush1.bf16.xpose.msra.mxu0 %v52
  %63 = vmatprep.subr.bf16.mxu0 0
  %64 = vmatpush1.bf16.xpose.msra.mxu0 %v53
  %65 = vmatprep.subr.bf16.mxu0 0
  %66 = vmatpush1.bf16.xpose.msra.mxu0 %v54
  %67 = vmatprep.subr.bf16.mxu0 0
  %68 = vmatpush1.bf16.xpose.msra.mxu0 %v55
  %69 = vmatprep.subr.bf16.mxu0 0
  %70 = vmatpush1.bf16.xpose.msra.mxu0 %v56
  %71 = vmatprep.subr.bf16.mxu0 0
  %72 = vmatpush1.bf16.xpose.msra.mxu0 %v57
  %73 = vmatprep.subr.bf16.mxu0 0
  %74 = vmatpush1.bf16.xpose.msra.mxu0 %v58
  %75 = vmatprep.subr.bf16.mxu0 0
  %76 = vmatpush1.bf16.xpose.msra.mxu0 0
  %77 = vmatprep.subr.bf16.mxu0 0
  %78 = vmatpush1.bf16.xpose.msra.mxu0 0
  %79 = vmatprep.subr.bf16.mxu0 0
  %80 = vmatpush1.bf16.xpose.msra.mxu0 0
  %81 = vmatprep.subr.bf16.mxu0 0
  %82 = vmatpush1.bf16.xpose.msra.mxu0 0
  %83 = vmatprep.subr.bf16.mxu0 0
  %84 = vmatpush1.bf16.xpose.msra.mxu0 0
  %85 = vmatprep.subr.bf16.mxu0 0
  %86 = vmatpush1.bf16.xpose.msra.mxu0 0
  %87 = vmatprep.subr.bf16.mxu0 0
  %88 = vmatpush1.bf16.xpose.msra.mxu0 0
  %89 = vmatprep.subr.bf16.mxu0 0
  %90 = vmatpush1.bf16.xpose.msra.mxu0 0
  %91 = vmatprep.mubr.bf16.mxu0 0
  %92 = vmatmul.mubr.bf16.gmra.mrb[0].mxu0 %v27
  %v93 = vpop.f32.mrb[0].mxu0
  %v94 = vadd.f32 0.0, %v93
  %v95 = vpop.f32.mrb[0].mxu0
  %v96 = vpop.f32.mrb[0].mxu0
  %v97 = vadd.f32 0.0, %v96
  %v98 = vpop.f32.mrb[0].mxu0
  %99 = vmatprep.mubr.bf16.mxu0 0
  %100 = vmatmul.mubr.bf16.gmra.mrb[0].mxu0 %v28
  %v101 = vpop.f32.mrb[0].mxu0
  %v102 = vadd.f32 0.0, %v101
  %v103 = vpop.f32.mrb[0].mxu0
  %v104 = vpop.f32.mrb[0].mxu0
  %v105 = vadd.f32 0.0, %v104
  %v106 = vpop.f32.mrb[0].mxu0
  %107 = vmatprep.mubr.bf16.mxu0 0
  %108 = vmatmul.mubr.bf16.gmra.mrb[0].mxu0 %v29
  %v109 = vpop.f32.mrb[0].mxu0
  %v110 = vadd.f32 0.0, %v109
  %v111 = vpop.f32.mrb[0].mxu0
  %v112 = vpop.f32.mrb[0].mxu0
  %v113 = vadd.f32 0.0, %v112
  %v114 = vpop.f32.mrb[0].mxu0
  %115 = vmatprep.mubr.bf16.mxu0 0
  %116 = vmatmul.mubr.bf16.gmra.mrb[0].mxu0 %v30
  %v117 = vpop.f32.mrb[0].mxu0
  %v118 = vadd.f32 0.0, %v117
  %v119 = vpop.f32.mrb[0].mxu0
  %v120 = vpop.f32.mrb[0].mxu0
  %v121 = vadd.f32 0.0, %v120
  %v122 = vpop.f32.mrb[0].mxu0
  %123 = vmatprep.mubr.bf16.mxu0 0
  %124 = vmatmul.mubr.bf16.gmra.mrb[0].mxu0 %v31
  %v125 = vpop.f32.mrb[0].mxu0
  %v126 = vadd.f32 0.0, %v125
  %v127 = vpop.f32.mrb[0].mxu0
  %v128 = vpop.f32.mrb[0].mxu0
  %v129 = vadd.f32 0.0, %v128
  %v130 = vpop.f32.mrb[0].mxu0
  %131 = vmatprep.mubr.bf16.mxu0 0
  %132 = vmatmul.mubr.bf16.gmra.mrb[0].mxu0 %v32
  %v133 = vpop.f32.mrb[0].mxu0
  %v134 = vadd.f32 0.0, %v133
  %v135 = vpop.f32.mrb[0].mxu0
  %v136 = vpop.f32.mrb[0].mxu0
  %v137 = vadd.f32 0.0, %v136
  %v138 = vpop.f32.mrb[0].mxu0
  %139 = vmatprep.mubr.bf16.mxu0 0
  %140 = vmatmul.mubr.bf16.gmra.mrb[0].mxu0 %v33
  %v141 = vpop.f32.mrb[0].mxu0
  %v142 = vadd.f32 0.0, %v141
  %v143 = vpop.f32.mrb[0].mxu0
  %v144 = vpop.f32.mrb[0].mxu0
  %v145 = vadd.f32 0.0, %v144
  %v146 = vpop.f32.mrb[0].mxu0
  %147 = vmatprep.mubr.bf16.mxu0 0
  %148 = vmatmul.mubr.bf16.gmra.mrb[0].mxu0 %v34
  %v149 = vpop.f32.mrb[0].mxu0
  %v150 = vadd.f32 0.0, %v149
  %v151 = vpop.f32.mrb[0].mxu0
  %v152 = vpop.f32.mrb[0].mxu0
  %v153 = vadd.f32 0.0, %v152
  %v154 = vpop.f32.mrb[0].mxu0
  %155 = vdwg.mxu0
  %v156 = vmul.f32 %v94, 0.5
  %v157 = vmul.f32 %v97, 0.5
  %v158 = vmul.f32 %v102, 0.5
  %v159 = vmul.f32 %v105, 0.5
  %v160 = vmul.f32 %v110, 0.5
  %v161 = vmul.f32 %v113, 0.5
  %v162 = vmul.f32 %v118, 0.5
  %v163 = vmul.f32 %v121, 0.5
  %v164 = vmul.f32 %v126, 0.5
  %v165 = vmul.f32 %v129, 0.5
  %v166 = vmul.f32 %v134, 0.5
  %v167 = vmul.f32 %v137, 0.5
  %v168 = vmul.f32 %v142, 0.5
  %v169 = vmul.f32 %v145, 0.5
  %v170 = vmul.f32 %v150, 0.5
  %v171 = vmul.f32 %v153, 0.5
  %v172 = vtanh.pop %v156
  %v173 = vtanh.pop %v157
  %v174 = vtanh.pop %v158
  %v175 = vtanh.pop %v159
  %v176 = vtanh.pop %v160
  %v177 = vtanh.pop %v161
  %v178 = vtanh.pop %v162
  %v179 = vtanh.pop %v163
  %v180 = vtanh.pop %v164
  %v181 = vtanh.pop %v165
  %v182 = vtanh.pop %v166
  %v183 = vtanh.pop %v167
  %v184 = vtanh.pop %v168
  %v185 = vtanh.pop %v169
  %v186 = vtanh.pop %v170
  %v187 = vtanh.pop %v171
  %v188 = vadd.f32 %v172, 1.0
  %v189 = vadd.f32 %v173, 1.0
  %v190 = vadd.f32 %v174, 1.0
  %v191 = vadd.f32 %v175, 1.0
  %v192 = vadd.f32 %v176, 1.0
  %v193 = vadd.f32 %v177, 1.0
  %v194 = vadd.f32 %v178, 1.0
  %v195 = vadd.f32 %v179, 1.0
  %v196 = vadd.f32 %v180, 1.0
  %v197 = vadd.f32 %v181, 1.0
  %v198 = vadd.f32 %v182, 1.0
  %v199 = vadd.f32 %v183, 1.0
  %v200 = vadd.f32 %v184, 1.0
  %v201 = vadd.f32 %v185, 1.0
  %v202 = vadd.f32 %v186, 1.0
  %v203 = vadd.f32 %v187, 1.0
  %v204 = vmul.f32 %v188, 0.5
  %v205 = vmul.f32 %v189, 0.5
  %v206 = vmul.f32 %v190, 0.5
  %v207 = vmul.f32 %v191, 0.5
  %v208 = vmul.f32 %v192, 0.5
  %v209 = vmul.f32 %v193, 0.5
  %v210 = vmul.f32 %v194, 0.5
  %v211 = vmul.f32 %v195, 0.5
  %v212 = vmul.f32 %v196, 0.5
  %v213 = vmul.f32 %v197, 0.5
  %v214 = vmul.f32 %v198, 0.5
  %v215 = vmul.f32 %v199, 0.5
  %v216 = vmul.f32 %v200, 0.5
  %v217 = vmul.f32 %v201, 0.5
  %v218 = vmul.f32 %v202, 0.5
  %v219 = vmul.f32 %v203, 0.5
  %v220 = vpack.c.bf16 %v205, %v204
  %v221 = vpack.c.bf16 %v207, %v206
  %v222 = vpack.c.bf16 %v209, %v208
  %v223 = vpack.c.bf16 %v211, %v210
  %v224 = vpack.c.bf16 %v213, %v212
  %v225 = vpack.c.bf16 %v215, %v214
  %v226 = vpack.c.bf16 %v217, %v216
  %v227 = vpack.c.bf16 %v219, %v218
  %v236 = vunpack.c.l.b16 %v220
  %v237 = vunpack.c.h.b16 %v220
  %v238 = vunpack.c.l.b16 %v221
  %v239 = vunpack.c.h.b16 %v221
  %v240 = vunpack.c.l.b16 %v222
  %v241 = vunpack.c.h.b16 %v222
  %v242 = vunpack.c.l.b16 %v223
  %v243 = vunpack.c.h.b16 %v223
  %v244 = vunpack.c.l.b16 %v224
  %v245 = vunpack.c.h.b16 %v224
  %v246 = vunpack.c.l.b16 %v225
  %v247 = vunpack.c.h.b16 %v225
  %v248 = vunpack.c.l.b16 %v226
  %v249 = vunpack.c.h.b16 %v226
  %v250 = vunpack.c.l.b16 %v227
  %v251 = vunpack.c.h.b16 %v227
  %v252 = vpack.c.b16 %v236, %v236
  %v253 = vpack.c.b16 %v237, %v237
  %v254 = vpack.c.b16 %v238, %v238
  %v255 = vpack.c.b16 %v239, %v239
  %v256 = vpack.c.b16 %v240, %v240
  %v257 = vpack.c.b16 %v241, %v241
  %v258 = vpack.c.b16 %v242, %v242
  %v259 = vpack.c.b16 %v243, %v243
  %v260 = vpack.c.b16 %v244, %v244
  %v261 = vpack.c.b16 %v245, %v245
  %v262 = vpack.c.b16 %v246, %v246
  %v263 = vpack.c.b16 %v247, %v247
  %v264 = vpack.c.b16 %v248, %v248
  %v265 = vpack.c.b16 %v249, %v249
  %v266 = vpack.c.b16 %v250, %v250
  %v267 = vpack.c.b16 %v251, %v251
  %284 = vst [vmem:[%s1] sm:$0xf] %v252
  %285 = vst [vmem:[%s1 + $0x4] sm:$0xf] %v253
  %286 = vst [vmem:[%s1 + $0x8] sm:$0xf] %v254
  %287 = vst [vmem:[%s1 + $0xc] sm:$0xf] %v255
  %288 = vst [vmem:[%s1 + $0x10] sm:$0xf] %v256
  %289 = vst [vmem:[%s1 + $0x14] sm:$0xf] %v257
  %290 = vst [vmem:[%s1 + $0x18] sm:$0xf] %v258
  %291 = vst [vmem:[%s1 + $0x1c] sm:$0xf] %v259
  %292 = vst [vmem:[%s1 + $0x20] sm:$0xf] %v260
  %293 = vst [vmem:[%s1 + $0x24] sm:$0xf] %v261
  %294 = vst [vmem:[%s1 + $0x28] sm:$0xf] %v262
  %295 = vst [vmem:[%s1 + $0x2c] sm:$0xf] %v263
  %296 = vst [vmem:[%s1 + $0x30] sm:$0xf] %v264
  %297 = vst [vmem:[%s1 + $0x34] sm:$0xf] %v265
  %298 = vst [vmem:[%s1 + $0x38] sm:$0xf] %v266
  %299 = vst [vmem:[%s1 + $0x3c] sm:$0xf] %v267
  // Predicated region
  $region6: #{daegc_forward.3} parent=0 // pred_check
    _
  $region7: #{daegc_forward.3} parent=0 // pred_check_branch
    %301 = sbr.rel (0) target = $region9
  $region8: #{daegc_forward.3} parent=0 // pred_region
    _
  $region9: #{daegc_forward.3} parent=0 // pred_fallthru
    _
  // Predicated region
  $region10: #{daegc_forward.3} parent=0 // pred_check
    _
  $region11: #{daegc_forward.3} parent=0 // pred_check_branch
    %303 = sbr.rel (0) target = $region13
  $region12: #{daegc_forward.3} parent=0 // pred_region
    _
  $region13: #{daegc_forward.3} parent=0 // pred_fallthru
    _

// kernel: daegc_forward.2
$region0: #{daegc_forward.2}
  #allocation0 [shape = 'u32[]', space=smem, size = 0x4, offset = 0x4, fixed_abs, tag = 'smem constant byte address 0x4 - core index']
  #allocation1 [shape = 'u32[144,128]{1,0:T(1,128)}', space=vmem, size = 0x12000, scoped, tag = 'internal scratch']
  %s0 = inlined_call_operand.vmem [shape: f32[128,32], index: 0, kind: input, shape index: {}]
  %s1 = inlined_call_operand.vmem [shape: bf16[128,128], index: 1, kind: input, shape index: {}]
  %s2 = inlined_call_operand.vmem [shape: bf16[128,128], index: 2, kind: input, shape index: {}]
  %s3 = inlined_call_operand.vmem [shape: f32[32,128], index: 3, kind: input, shape index: {}]
  %s4 = inlined_call_operand.vmem [shape: f32[1,128], index: 4, kind: input, shape index: {}]
  %s5 = inlined_call_operand.vmem [shape: f32[1,128], index: 5, kind: input, shape index: {}]
  %s6 = inlined_call_operand.vmem [shape: f32[128,128], index: 6, kind: input, shape index: {}]
  %s7 = inlined_call_operand.vmem [shape: f32[1,128], index: 7, kind: input, shape index: {}]
  %s8 = inlined_call_operand.vmem [shape: f32[1,128], index: 8, kind: input, shape index: {}]
  %s9 = inlined_call_operand.vmem [shape: f32[4,128], index: 9, kind: input, shape index: {}]
  %s10 = inlined_call_operand.vmem [shape: f32[128,128], index: 10, kind: output, shape index: {0}]
  %s11 = inlined_call_operand.vmem [shape: f32[128,4], index: 11, kind: output, shape index: {1}]
  %12 = xla_tuple %s10, %s11
  %s13 = sld [smem:[#allocation0]]
  $region58: #{daegc_forward.2} parent=0
    _
  %s15 = ssub.s32 1, %s13
  %s16 = scalar_select 0, %s15, %s13
  // Predicated region
  $region2: #{daegc_forward.2} parent=0 // pred_check
    _
  $region3: #{daegc_forward.2} parent=0 // pred_check_branch
    %18 = sbr.rel (0) target = $region5
  $region4: #{daegc_forward.2} parent=0 // pred_region
    _
  $region5: #{daegc_forward.2} parent=0 // pred_fallthru
    _
  // Predicated region
  $region6: #{daegc_forward.2} parent=0 // pred_check
    _
  $region7: #{daegc_forward.2} parent=0 // pred_check_branch
    %20 = sbr.rel (0) target = $region9
  $region8: #{daegc_forward.2} parent=0 // pred_region
    _
  $region9: #{daegc_forward.2} parent=0 // pred_fallthru
    _
  // Predicated region
  $region10: #{daegc_forward.2} parent=0 // pred_check
    _
  $region11: #{daegc_forward.2} parent=0 // pred_check_branch
    %22 = sbr.rel (0) target = $region13
  $region12: #{daegc_forward.2} parent=0 // pred_region
    _
  $region13: #{daegc_forward.2} parent=0 // pred_fallthru
    _
  // Predicated region
  $region14: #{daegc_forward.2} parent=0 // pred_check
    _
  $region15: #{daegc_forward.2} parent=0 // pred_check_branch
    %24 = sbr.rel (0) target = $region17
  $region16: #{daegc_forward.2} parent=0 // pred_region
    _
  $region17: #{daegc_forward.2} parent=0 // pred_fallthru
    _
  // Predicated region
  $region18: #{daegc_forward.2} parent=0 // pred_check
    _
  $region19: #{daegc_forward.2} parent=0 // pred_check_branch
    %26 = sbr.rel (0) target = $region21
  $region20: #{daegc_forward.2} parent=0 // pred_region
    _
  $region21: #{daegc_forward.2} parent=0 // pred_fallthru
    _
  // Predicated region
  $region22: #{daegc_forward.2} parent=0 // pred_check
    _
  $region23: #{daegc_forward.2} parent=0 // pred_check_branch
    %28 = sbr.rel (0) target = $region25
  $region24: #{daegc_forward.2} parent=0 // pred_region
    _
  $region25: #{daegc_forward.2} parent=0 // pred_fallthru
    _
  // Predicated region
  $region26: #{daegc_forward.2} parent=0 // pred_check
    _
  $region27: #{daegc_forward.2} parent=0 // pred_check_branch
    %30 = sbr.rel (0) target = $region29
  $region28: #{daegc_forward.2} parent=0 // pred_region
    _
  $region29: #{daegc_forward.2} parent=0 // pred_fallthru
    _
  // Predicated region
  $region30: #{daegc_forward.2} parent=0 // pred_check
    _
  $region31: #{daegc_forward.2} parent=0 // pred_check_branch
    %32 = sbr.rel (0) target = $region33
  $region32: #{daegc_forward.2} parent=0 // pred_region
    _
  $region33: #{daegc_forward.2} parent=0 // pred_fallthru
    _
  // Predicated region
  $region34: #{daegc_forward.2} parent=0 // pred_check
    _
  $region35: #{daegc_forward.2} parent=0 // pred_check_branch
    %34 = sbr.rel (0) target = $region37
  $region36: #{daegc_forward.2} parent=0 // pred_region
    _
  $region37: #{daegc_forward.2} parent=0 // pred_fallthru
    _
  // Predicated region
  $region38: #{daegc_forward.2} parent=0 // pred_check
    _
  $region39: #{daegc_forward.2} parent=0 // pred_check_branch
    %36 = sbr.rel (0) target = $region41
  $region40: #{daegc_forward.2} parent=0 // pred_region
    _
  $region41: #{daegc_forward.2} parent=0 // pred_fallthru
    _
  %v40 = vld [vmem:[%s1] sm:$0xf]
  %v41 = vld [vmem:[%s1 + $0x4] sm:$0xf]
  %v42 = vld [vmem:[%s1 + $0x8] sm:$0xf]
  %v43 = vld [vmem:[%s1 + $0xc] sm:$0xf]
  %v44 = vld [vmem:[%s1 + $0x10] sm:$0xf]
  %v45 = vld [vmem:[%s1 + $0x14] sm:$0xf]
  %v46 = vld [vmem:[%s1 + $0x18] sm:$0xf]
  %v47 = vld [vmem:[%s1 + $0x1c] sm:$0xf]
  %v48 = vld [vmem:[%s1 + $0x20] sm:$0xf]
  %v49 = vld [vmem:[%s1 + $0x24] sm:$0xf]
  %v50 = vld [vmem:[%s1 + $0x28] sm:$0xf]
  %v51 = vld [vmem:[%s1 + $0x2c] sm:$0xf]
  %v52 = vld [vmem:[%s1 + $0x30] sm:$0xf]
  %v53 = vld [vmem:[%s1 + $0x34] sm:$0xf]
  %v54 = vld [vmem:[%s1 + $0x38] sm:$0xf]
  %v55 = vld [vmem:[%s1 + $0x3c] sm:$0xf]
  %v56 = vld [vmem:[%s2] sm:$0xf]
  %v57 = vld [vmem:[%s2 + $0x4] sm:$0xf]
  %v58 = vld [vmem:[%s2 + $0x8] sm:$0xf]
  %v59 = vld [vmem:[%s2 + $0xc] sm:$0xf]
  %v60 = vld [vmem:[%s2 + $0x10] sm:$0xf]
  %v61 = vld [vmem:[%s2 + $0x14] sm:$0xf]
  %v62 = vld [vmem:[%s2 + $0x18] sm:$0xf]
  %v63 = vld [vmem:[%s2 + $0x1c] sm:$0xf]
  %v64 = vld [vmem:[%s2 + $0x20] sm:$0xf]
  %v65 = vld [vmem:[%s2 + $0x24] sm:$0xf]
  %v66 = vld [vmem:[%s2 + $0x28] sm:$0xf]
  %v67 = vld [vmem:[%s2 + $0x2c] sm:$0xf]
  %v68 = vld [vmem:[%s2 + $0x30] sm:$0xf]
  %v69 = vld [vmem:[%s2 + $0x34] sm:$0xf]
  %v70 = vld [vmem:[%s2 + $0x38] sm:$0xf]
  %v71 = vld [vmem:[%s2 + $0x3c] sm:$0xf]
  %v72 = vunpack.c.l.bf16 %v56
  %v73 = vunpack.c.l.bf16 %v57
  %v74 = vunpack.c.l.bf16 %v58
  %v75 = vunpack.c.l.bf16 %v59
  %v76 = vunpack.c.l.bf16 %v60
  %v77 = vunpack.c.l.bf16 %v61
  %v78 = vunpack.c.l.bf16 %v62
  %v79 = vunpack.c.l.bf16 %v63
  %v80 = vunpack.c.l.bf16 %v64
  %v81 = vunpack.c.l.bf16 %v65
  %v82 = vunpack.c.l.bf16 %v66
  %v83 = vunpack.c.l.bf16 %v67
  %v84 = vunpack.c.l.bf16 %v68
  %v85 = vunpack.c.l.bf16 %v69
  %v86 = vunpack.c.l.bf16 %v70
  %v87 = vunpack.c.l.bf16 %v71
  %v88 = vld [vmem:[%s0] sm:$0xff]
  %v89 = vld [vmem:[%s0 + $0x8] sm:$0xff]
  %v90 = vld [vmem:[%s0 + $0x10] sm:$0xff]
  %v91 = vld [vmem:[%s0 + $0x18] sm:$0xff]
  %v92 = vld [vmem:[%s0 + $0x20] sm:$0xff]
  %v93 = vld [vmem:[%s0 + $0x28] sm:$0xff]
  %v94 = vld [vmem:[%s0 + $0x30] sm:$0xff]
  %v95 = vld [vmem:[%s0 + $0x38] sm:$0xff]
  %v96 = vld [vmem:[%s0 + $0x40] sm:$0xff]
  %v97 = vld [vmem:[%s0 + $0x48] sm:$0xff]
  %v98 = vld [vmem:[%s0 + $0x50] sm:$0xff]
  %v99 = vld [vmem:[%s0 + $0x58] sm:$0xff]
  %v100 = vld [vmem:[%s0 + $0x60] sm:$0xff]
  %v101 = vld [vmem:[%s0 + $0x68] sm:$0xff]
  %v102 = vld [vmem:[%s0 + $0x70] sm:$0xff]
  %v103 = vld [vmem:[%s0 + $0x78] sm:$0xff]
  %v104 = vpack.c.bf16 %v89, %v88
  %v105 = vpack.c.bf16 %v91, %v90
  %v106 = vpack.c.bf16 %v93, %v92
  %v107 = vpack.c.bf16 %v95, %v94
  %v108 = vpack.c.bf16 %v97, %v96
  %v109 = vpack.c.bf16 %v99, %v98
  %v110 = vpack.c.bf16 %v101, %v100
  %v111 = vpack.c.bf16 %v103, %v102
  %v112 = vld [vmem:[%s3] sm:$0xff]
  %v113 = vld [vmem:[%s3 + $0x8] sm:$0xff]
  %v114 = vld [vmem:[%s3 + $0x10] sm:$0xff]
  %v115 = vld [vmem:[%s3 + $0x18] sm:$0xff]
  %v116 = vpack.c.bf16 %v113, %v112
  %v117 = vpack.c.bf16 %v115, %v114
  %vm118 = vcmask 261120
  %v120 = vsel %vm118, %v104, 0
  %v123 = vsel %vm118, %v105, 0
  %v126 = vsel %vm118, %v106, 0
  %v129 = vsel %vm118, %v107, 0
  %v132 = vsel %vm118, %v108, 0
  %v135 = vsel %vm118, %v109, 0
  %v138 = vsel %vm118, %v110, 0
  %v141 = vsel %vm118, %v111, 0
  %143 = vmatprep.subr.bf16.mxu0 0
  %144 = vmatpush1.bf16.msra.mxu0 %v116
  %145 = vmatprep.subr.bf16.mxu0 0
  %146 = vmatpush1.bf16.msra.mxu0 %v117
  %147 = vmatprep.subr.bf16.mxu0 0
  %148 = vmatpush1.bf16.msra.mxu0 0
  %149 = vmatprep.subr.bf16.mxu0 0
  %150 = vmatpush1.bf16.msra.mxu0 0
  %151 = vmatprep.subr.bf16.mxu0 0
  %152 = vmatpush1.bf16.msra.mxu0 0
  %153 = vmatprep.subr.bf16.mxu0 0
  %154 = vmatpush1.bf16.msra.mxu0 0
  %155 = vmatprep.subr.bf16.mxu0 0
  %156 = vmatpush1.bf16.msra.mxu0 0
  %157 = vmatprep.subr.bf16.mxu0 0
  %158 = vmatpush1.bf16.msra.mxu0 0
  %159 = vmatprep.subr.bf16.mxu0 0
  %160 = vmatpush1.bf16.msra.mxu0 0
  %161 = vmatprep.subr.bf16.mxu0 0
  %162 = vmatpush1.bf16.msra.mxu0 0
  %163 = vmatprep.subr.bf16.mxu0 0
  %164 = vmatpush1.bf16.msra.mxu0 0
  %165 = vmatprep.subr.bf16.mxu0 0
  %166 = vmatpush1.bf16.msra.mxu0 0
  %167 = vmatprep.subr.bf16.mxu0 0
  %168 = vmatpush1.bf16.msra.mxu0 0
  %169 = vmatprep.subr.bf16.mxu0 0
  %170 = vmatpush1.bf16.msra.mxu0 0
  %171 = vmatprep.subr.bf16.mxu0 0
  %172 = vmatpush1.bf16.msra.mxu0 0
  %173 = vmatprep.subr.bf16.mxu0 0
  %174 = vmatpush1.bf16.msra.mxu0 0
  %175 = vmatprep.mubr.bf16.mxu0 0
  %176 = vmatmul.mubr.bf16.gmra.mrb[0].mxu0 %v120
  %v177 = vpop.f32.mrb[0].mxu0
  %v178 = vadd.f32 0.0, %v177
  %v179 = vpop.f32.mrb[0].mxu0
  %v180 = vpop.f32.mrb[0].mxu0
  %v181 = vadd.f32 0.0, %v180
  %v182 = vpop.f32.mrb[0].mxu0
  %183 = vmatprep.mubr.bf16.mxu0 0
  %184 = vmatmul.mubr.bf16.gmra.mrb[0].mxu0 %v123
  %v185 = vpop.f32.mrb[0].mxu0
  %v186 = vadd.f32 0.0, %v185
  %v187 = vpop.f32.mrb[0].mxu0
  %v188 = vpop.f32.mrb[0].mxu0
  %v189 = vadd.f32 0.0, %v188
  %v190 = vpop.f32.mrb[0].mxu0
  %191 = vmatprep.mubr.bf16.mxu0 0
  %192 = vmatmul.mubr.bf16.gmra.mrb[0].mxu0 %v126
  %v193 = vpop.f32.mrb[0].mxu0
  %v194 = vadd.f32 0.0, %v193
  %v195 = vpop.f32.mrb[0].mxu0
  %v196 = vpop.f32.mrb[0].mxu0
  %v197 = vadd.f32 0.0, %v196
  %v198 = vpop.f32.mrb[0].mxu0
  %199 = vmatprep.mubr.bf16.mxu0 0
  %200 = vmatmul.mubr.bf16.gmra.mrb[0].mxu0 %v129
  %v201 = vpop.f32.mrb[0].mxu0
  %v202 = vadd.f32 0.0, %v201
  %v203 = vpop.f32.mrb[0].mxu0
  %v204 = vpop.f32.mrb[0].mxu0
  %v205 = vadd.f32 0.0, %v204
  %v206 = vpop.f32.mrb[0].mxu0
  %207 = vmatprep.mubr.bf16.mxu0 0
  %208 = vmatmul.mubr.bf16.gmra.mrb[0].mxu0 %v132
  %v209 = vpop.f32.mrb[0].mxu0
  %v210 = vadd.f32 0.0, %v209
  %v211 = vpop.f32.mrb[0].mxu0
  %v212 = vpop.f32.mrb[0].mxu0
  %v213 = vadd.f32 0.0, %v212
  %v214 = vpop.f32.mrb[0].mxu0
  %215 = vmatprep.mubr.bf16.mxu0 0
  %216 = vmatmul.mubr.bf16.gmra.mrb[0].mxu0 %v135
  %v217 = vpop.f32.mrb[0].mxu0
  %v218 = vadd.f32 0.0, %v217
  %v219 = vpop.f32.mrb[0].mxu0
  %v220 = vpop.f32.mrb[0].mxu0
  %v221 = vadd.f32 0.0, %v220
  %v222 = vpop.f32.mrb[0].mxu0
  %223 = vmatprep.mubr.bf16.mxu0 0
  %224 = vmatmul.mubr.bf16.gmra.mrb[0].mxu0 %v138
  %v225 = vpop.f32.mrb[0].mxu0
  %v226 = vadd.f32 0.0, %v225
  %v227 = vpop.f32.mrb[0].mxu0
  %v228 = vpop.f32.mrb[0].mxu0
  %v229 = vadd.f32 0.0, %v228
  %v230 = vpop.f32.mrb[0].mxu0
  %231 = vmatprep.mubr.bf16.mxu0 0
  %232 = vmatmul.mubr.bf16.gmra.mrb[0].mxu0 %v141
  %v233 = vpop.f32.mrb[0].mxu0
  %v234 = vadd.f32 0.0, %v233
  %v235 = vpop.f32.mrb[0].mxu0
  %v236 = vpop.f32.mrb[0].mxu0
  %v237 = vadd.f32 0.0, %v236
  %v238 = vpop.f32.mrb[0].mxu0
  %239 = vdwg.mxu0
  %v240 = vld [vmem:[%s4] sm:$0x1]
  %v241 = vld [vmem:[%s5] sm:$0x1]
  %v243 = vlaneseq
  %v244 = vshrl.u32 %v243, 7
  %v245 = vsub.s32 0, %v244
  %v246 = vrot.slane %v240, %v245
  %v248 = vmul.f32 %v178, %v246
  %v249 = vmul.f32 %v181, %v246
  %v250 = vmul.f32 %v186, %v246
  %v251 = vmul.f32 %v189, %v246
  %v252 = vmul.f32 %v194, %v246
  %v253 = vmul.f32 %v197, %v246
  %v254 = vmul.f32 %v202, %v246
  %v255 = vmul.f32 %v205, %v246
  %v256 = vmul.f32 %v210, %v246
  %v257 = vmul.f32 %v213, %v246
  %v258 = vmul.f32 %v218, %v246
  %v259 = vmul.f32 %v221, %v246
  %v260 = vmul.f32 %v226, %v246
  %v261 = vmul.f32 %v229, %v246
  %v262 = vmul.f32 %v234, %v246
  %v263 = vmul.f32 %v237, %v246
  %264 = vadd.xlane.f32.xlu0 %v248
  %v265 = vpop.xlane.xlu0 %264
  %266 = vadd.xlane.f32.xlu0 %v249
  %v267 = vpop.xlane.xlu0 %266
  %268 = vadd.xlane.f32.xlu0 %v250
  %v269 = vpop.xlane.xlu0 %268
  %270 = vadd.xlane.f32.xlu0 %v251
  %v271 = vpop.xlane.xlu0 %270
  %272 = vadd.xlane.f32.xlu0 %v252
  %v273 = vpop.xlane.xlu0 %272
  %274 = vadd.xlane.f32.xlu0 %v253
  %v275 = vpop.xlane.xlu0 %274
  %276 = vadd.xlane.f32.xlu0 %v254
  %v277 = vpop.xlane.xlu0 %276
  %278 = vadd.xlane.f32.xlu0 %v255
  %v279 = vpop.xlane.xlu0 %278
  %280 = vadd.xlane.f32.xlu0 %v256
  %v281 = vpop.xlane.xlu0 %280
  %282 = vadd.xlane.f32.xlu0 %v257
  %v283 = vpop.xlane.xlu0 %282
  %284 = vadd.xlane.f32.xlu0 %v258
  %v285 = vpop.xlane.xlu0 %284
  %286 = vadd.xlane.f32.xlu0 %v259
  %v287 = vpop.xlane.xlu0 %286
  %288 = vadd.xlane.f32.xlu0 %v260
  %v289 = vpop.xlane.xlu0 %288
  %290 = vadd.xlane.f32.xlu0 %v261
  %v291 = vpop.xlane.xlu0 %290
  %292 = vadd.xlane.f32.xlu0 %v262
  %v293 = vpop.xlane.xlu0 %292
  %294 = vadd.xlane.f32.xlu0 %v263
  %v295 = vpop.xlane.xlu0 %294
  %296 = vmatprep.subr.mxu0 0.0
  %297 = vmatpush1.xpose.msra.mxu0 %v178
  %298 = vmatprep.subr.mxu0 0.0
  %299 = vmatpush1.xpose.msra.mxu0 %v181
  %300 = vmatprep.subr.mxu0 0.0
  %301 = vmatpush1.xpose.msra.mxu0 %v186
  %302 = vmatprep.subr.mxu0 0.0
  %303 = vmatpush1.xpose.msra.mxu0 %v189
  %304 = vmatprep.subr.mxu0 0.0
  %305 = vmatpush1.xpose.msra.mxu0 %v194
  %306 = vmatprep.subr.mxu0 0.0
  %307 = vmatpush1.xpose.msra.mxu0 %v197
  %308 = vmatprep.subr.mxu0 0.0
  %309 = vmatpush1.xpose.msra.mxu0 %v202
  %310 = vmatprep.subr.mxu0 0.0
  %311 = vmatpush1.xpose.msra.mxu0 %v205
  %312 = vmatprep.subr.mxu0 0.0
  %313 = vmatpush1.xpose.msra.mxu0 %v210
  %314 = vmatprep.subr.mxu0 0.0
  %315 = vmatpush1.xpose.msra.mxu0 %v213
  %316 = vmatprep.subr.mxu0 0.0
  %317 = vmatpush1.xpose.msra.mxu0 %v218
  %318 = vmatprep.subr.mxu0 0.0
  %319 = vmatpush1.xpose.msra.mxu0 %v221
  %320 = vmatprep.subr.mxu0 0.0
  %321 = vmatpush1.xpose.msra.mxu0 %v226
  %322 = vmatprep.subr.mxu0 0.0
  %323 = vmatpush1.xpose.msra.mxu0 %v229
  %324 = vmatprep.subr.mxu0 0.0
  %325 = vmatpush1.xpose.msra.mxu0 %v234
  %326 = vmatprep.subr.mxu0 0.0
  %327 = vmatpush1.xpose.msra.mxu0 %v237
  %328 = vmatprep.subr.mxu0 0.0
  %329 = vmatpush1.xpose.msra.mxu0 0.0
  %330 = vmatprep.subr.mxu0 0.0
  %331 = vmatpush1.xpose.msra.mxu0 0.0
  %332 = vmatprep.subr.mxu0 0.0
  %333 = vmatpush1.xpose.msra.mxu0 0.0
  %334 = vmatprep.subr.mxu0 0.0
  %335 = vmatpush1.xpose.msra.mxu0 0.0
  %336 = vmatprep.subr.mxu0 0.0
  %337 = vmatpush1.xpose.msra.mxu0 0.0
  %338 = vmatprep.subr.mxu0 0.0
  %339 = vmatpush1.xpose.msra.mxu0 0.0
  %340 = vmatprep.subr.mxu0 0.0
  %341 = vmatpush1.xpose.msra.mxu0 0.0
  %342 = vmatprep.subr.mxu0 0.0
  %343 = vmatpush1.xpose.msra.mxu0 0.0
  %344 = vmatprep.subr.mxu0 0.0
  %345 = vmatpush1.xpose.msra.mxu0 0.0
  %346 = vmatprep.subr.mxu0 0.0
  %347 = vmatpush1.xpose.msra.mxu0 0.0
  %348 = vmatprep.subr.mxu0 0.0
  %349 = vmatpush1.xpose.msra.mxu0 0.0
  %350 = vmatprep.subr.mxu0 0.0
  %351 = vmatpush1.xpose.msra.mxu0 0.0
  %352 = vmatprep.subr.mxu0 0.0
  %353 = vmatpush1.xpose.msra.mxu0 0.0
  %354 = vmatprep.subr.mxu0 0.0
  %355 = vmatpush1.xpose.msra.mxu0 0.0
  %356 = vmatprep.subr.mxu0 0.0
  %357 = vmatpush1.xpose.msra.mxu0 0.0
  %358 = vmatprep.subr.mxu0 0.0
  %359 = vmatpush1.xpose.msra.mxu0 0.0
  %360 = vmatprep.mubr.f32.mxu0 0.0
  %361 = vmatmul.mubr.f32.gmra.mrb[0].mxu0 %v241
  %v362 = vpop.f32.mrb[0].mxu0
  %v363 = vadd.f32 0.0, %v362
  %v364 = vpop.f32.mrb[0].mxu0
  %365 = vdwg.mxu0
  %v366 = vlaneseq
  %v367 = vshrl.u32 %v366, 7
  %v368 = vsub.s32 0, %v367
  %v369 = vrot.slane %v363, %v368
  %v370 = vadd.f32 %v265, %v369
  %v371 = vadd.f32 %v267, %v369
  %v372 = vadd.f32 %v269, %v369
  %v373 = vadd.f32 %v271, %v369
  %v374 = vadd.f32 %v273, %v369
  %v375 = vadd.f32 %v275, %v369
  %v376 = vadd.f32 %v277, %v369
  %v377 = vadd.f32 %v279, %v369
  %v378 = vadd.f32 %v281, %v369
  %v379 = vadd.f32 %v283, %v369
  %v380 = vadd.f32 %v285, %v369
  %v381 = vadd.f32 %v287, %v369
  %v382 = vadd.f32 %v289, %v369
  %v383 = vadd.f32 %v291, %v369
  %v384 = vadd.f32 %v293, %v369
  %v385 = vadd.f32 %v295, %v369
  %v386 = vmul.f32 %v370, %v72
  %v387 = vmul.f32 %v371, %v73
  %v388 = vmul.f32 %v372, %v74
  %v389 = vmul.f32 %v373, %v75
  %v390 = vmul.f32 %v374, %v76
  %v391 = vmul.f32 %v375, %v77
  %v392 = vmul.f32 %v376, %v78
  %v393 = vmul.f32 %v377, %v79
  %v394 = vmul.f32 %v378, %v80
  %v395 = vmul.f32 %v379, %v81
  %v396 = vmul.f32 %v380, %v82
  %v397 = vmul.f32 %v381, %v83
  %v398 = vmul.f32 %v382, %v84
  %v399 = vmul.f32 %v383, %v85
  %v400 = vmul.f32 %v384, %v86
  %v401 = vmul.f32 %v385, %v87
  %vm402 = vcmp.gt.f32.partialorder %v386, 0.0
  %vm403 = vcmp.gt.f32.partialorder %v387, 0.0
  %vm404 = vcmp.gt.f32.partialorder %v388, 0.0
  %vm405 = vcmp.gt.f32.partialorder %v389, 0.0
  %vm406 = vcmp.gt.f32.partialorder %v390, 0.0
  %vm407 = vcmp.gt.f32.partialorder %v391, 0.0
  %vm408 = vcmp.gt.f32.partialorder %v392, 0.0
  %vm409 = vcmp.gt.f32.partialorder %v393, 0.0
  %vm410 = vcmp.gt.f32.partialorder %v394, 0.0
  %vm411 = vcmp.gt.f32.partialorder %v395, 0.0
  %vm412 = vcmp.gt.f32.partialorder %v396, 0.0
  %vm413 = vcmp.gt.f32.partialorder %v397, 0.0
  %vm414 = vcmp.gt.f32.partialorder %v398, 0.0
  %vm415 = vcmp.gt.f32.partialorder %v399, 0.0
  %vm416 = vcmp.gt.f32.partialorder %v400, 0.0
  %vm417 = vcmp.gt.f32.partialorder %v401, 0.0
  %v418 = vmul.f32 %v386, 0.2
  %v419 = vmul.f32 %v387, 0.2
  %v420 = vmul.f32 %v388, 0.2
  %v421 = vmul.f32 %v389, 0.2
  %v422 = vmul.f32 %v390, 0.2
  %v423 = vmul.f32 %v391, 0.2
  %v424 = vmul.f32 %v392, 0.2
  %v425 = vmul.f32 %v393, 0.2
  %v426 = vmul.f32 %v394, 0.2
  %v427 = vmul.f32 %v395, 0.2
  %v428 = vmul.f32 %v396, 0.2
  %v429 = vmul.f32 %v397, 0.2
  %v430 = vmul.f32 %v398, 0.2
  %v431 = vmul.f32 %v399, 0.2
  %v432 = vmul.f32 %v400, 0.2
  %v433 = vmul.f32 %v401, 0.2
  %v434 = vsel %vm402, %v386, %v418
  %v435 = vsel %vm403, %v387, %v419
  %v436 = vsel %vm404, %v388, %v420
  %v437 = vsel %vm405, %v389, %v421
  %v438 = vsel %vm406, %v390, %v422
  %v439 = vsel %vm407, %v391, %v423
  %v440 = vsel %vm408, %v392, %v424
  %v441 = vsel %vm409, %v393, %v425
  %v442 = vsel %vm410, %v394, %v426
  %v443 = vsel %vm411, %v395, %v427
  %v444 = vsel %vm412, %v396, %v428
  %v445 = vsel %vm413, %v397, %v429
  %v446 = vsel %vm414, %v398, %v430
  %v447 = vsel %vm415, %v399, %v431
  %v448 = vsel %vm416, %v400, %v432
  %v449 = vsel %vm417, %v401, %v433
  %vm450 = vcmp.gt.bf16.partialorder %v40, 0
  %vm451 = vcmp.gt.bf16.partialorder %v41, 0
  %vm452 = vcmp.gt.bf16.partialorder %v42, 0
  %vm453 = vcmp.gt.bf16.partialorder %v43, 0
  %vm454 = vcmp.gt.bf16.partialorder %v44, 0
  %vm455 = vcmp.gt.bf16.partialorder %v45, 0
  %vm456 = vcmp.gt.bf16.partialorder %v46, 0
  %vm457 = vcmp.gt.bf16.partialorder %v47, 0
  %vm458 = vcmp.gt.bf16.partialorder %v48, 0
  %vm459 = vcmp.gt.bf16.partialorder %v49, 0
  %vm460 = vcmp.gt.bf16.partialorder %v50, 0
  %vm461 = vcmp.gt.bf16.partialorder %v51, 0
  %vm462 = vcmp.gt.bf16.partialorder %v52, 0
  %vm463 = vcmp.gt.bf16.partialorder %v53, 0
  %vm464 = vcmp.gt.bf16.partialorder %v54, 0
  %vm465 = vcmp.gt.bf16.partialorder %v55, 0
  %v466 = vsel %vm450, 65537, 0
  %v467 = vsel %vm451, 65537, 0
  %v468 = vsel %vm452, 65537, 0
  %v469 = vsel %vm453, 65537, 0
  %v470 = vsel %vm454, 65537, 0
  %v471 = vsel %vm455, 65537, 0
  %v472 = vsel %vm456, 65537, 0
  %v473 = vsel %vm457, 65537, 0
  %v474 = vsel %vm458, 65537, 0
  %v475 = vsel %vm459, 65537, 0
  %v476 = vsel %vm460, 65537, 0
  %v477 = vsel %vm461, 65537, 0
  %v478 = vsel %vm462, 65537, 0
  %v479 = vsel %vm463, 65537, 0
  %v480 = vsel %vm464, 65537, 0
  %v481 = vsel %vm465, 65537, 0
  %v482 = vunpack.c.l.b16 %v466
  %v483 = vunpack.c.l.b16 %v467
  %v484 = vunpack.c.l.b16 %v468
  %v485 = vunpack.c.l.b16 %v469
  %v486 = vunpack.c.l.b16 %v470
  %v487 = vunpack.c.l.b16 %v471
  %v488 = vunpack.c.l.b16 %v472
  %v489 = vunpack.c.l.b16 %v473
  %v490 = vunpack.c.l.b16 %v474
  %v491 = vunpack.c.l.b16 %v475
  %v492 = vunpack.c.l.b16 %v476
  %v493 = vunpack.c.l.b16 %v477
  %v494 = vunpack.c.l.b16 %v478
  %v495 = vunpack.c.l.b16 %v479
  %v496 = vunpack.c.l.b16 %v480
  %v497 = vunpack.c.l.b16 %v481
  %vm498 = vcmp.ne.s32.totalorder %v482, 0
  %vm499 = vcmp.ne.s32.totalorder %v483, 0
  %vm500 = vcmp.ne.s32.totalorder %v484, 0
  %vm501 = vcmp.ne.s32.totalorder %v485, 0
  %vm502 = vcmp.ne.s32.totalorder %v486, 0
  %vm503 = vcmp.ne.s32.totalorder %v487, 0
  %vm504 = vcmp.ne.s32.totalorder %v488, 0
  %vm505 = vcmp.ne.s32.totalorder %v489, 0
  %vm506 = vcmp.ne.s32.totalorder %v490, 0
  %vm507 = vcmp.ne.s32.totalorder %v491, 0
  %vm508 = vcmp.ne.s32.totalorder %v492, 0
  %vm509 = vcmp.ne.s32.totalorder %v493, 0
  %vm510 = vcmp.ne.s32.totalorder %v494, 0
  %vm511 = vcmp.ne.s32.totalorder %v495, 0
  %vm512 = vcmp.ne.s32.totalorder %v496, 0
  %vm513 = vcmp.ne.s32.totalorder %v497, 0
  %v514 = vsel %vm498, %v434, -9e+15
  %v515 = vsel %vm499, %v435, -9e+15
  %v516 = vsel %vm500, %v436, -9e+15
  %v517 = vsel %vm501, %v437, -9e+15
  %v518 = vsel %vm502, %v438, -9e+15
  %v519 = vsel %vm503, %v439, -9e+15
  %v520 = vsel %vm504, %v440, -9e+15
  %v521 = vsel %vm505, %v441, -9e+15
  %v522 = vsel %vm506, %v442, -9e+15
  %v523 = vsel %vm507, %v443, -9e+15
  %v524 = vsel %vm508, %v444, -9e+15
  %v525 = vsel %vm509, %v445, -9e+15
  %v526 = vsel %vm510, %v446, -9e+15
  %v527 = vsel %vm511, %v447, -9e+15
  %v528 = vsel %vm512, %v448, -9e+15
  %v529 = vsel %vm513, %v449, -9e+15
  %530 = vmax.xlane.f32.xlu0 %v514
  %v531 = vpop.xlane.xlu0 %530
  %532 = vmax.xlane.f32.xlu0 %v515
  %v533 = vpop.xlane.xlu0 %532
  %534 = vmax.xlane.f32.xlu0 %v516
  %v535 = vpop.xlane.xlu0 %534
  %536 = vmax.xlane.f32.xlu0 %v517
  %v537 = vpop.xlane.xlu0 %536
  %538 = vmax.xlane.f32.xlu0 %v518
  %v539 = vpop.xlane.xlu0 %538
  %540 = vmax.xlane.f32.xlu0 %v519
  %v541 = vpop.xlane.xlu0 %540
  %542 = vmax.xlane.f32.xlu0 %v520
  %v543 = vpop.xlane.xlu0 %542
  %544 = vmax.xlane.f32.xlu0 %v521
  %v545 = vpop.xlane.xlu0 %544
  %546 = vmax.xlane.f32.xlu0 %v522
  %v547 = vpop.xlane.xlu0 %546
  %548 = vmax.xlane.f32.xlu0 %v523
  %v549 = vpop.xlane.xlu0 %548
  %550 = vmax.xlane.f32.xlu0 %v524
  %v551 = vpop.xlane.xlu0 %550
  %552 = vmax.xlane.f32.xlu0 %v525
  %v553 = vpop.xlane.xlu0 %552
  %554 = vmax.xlane.f32.xlu0 %v526
  %v555 = vpop.xlane.xlu0 %554
  %556 = vmax.xlane.f32.xlu0 %v527
  %v557 = vpop.xlane.xlu0 %556
  %558 = vmax.xlane.f32.xlu0 %v528
  %v559 = vpop.xlane.xlu0 %558
  %560 = vmax.xlane.f32.xlu0 %v529
  %v561 = vpop.xlane.xlu0 %560
  %v562 = vsub.f32 %v514, %v531
  %v563 = vsub.f32 %v515, %v533
  %v564 = vsub.f32 %v516, %v535
  %v565 = vsub.f32 %v517, %v537
  %v566 = vsub.f32 %v518, %v539
  %v567 = vsub.f32 %v519, %v541
  %v568 = vsub.f32 %v520, %v543
  %v569 = vsub.f32 %v521, %v545
  %v570 = vsub.f32 %v522, %v547
  %v571 = vsub.f32 %v523, %v549
  %v572 = vsub.f32 %v524, %v551
  %v573 = vsub.f32 %v525, %v553
  %v574 = vsub.f32 %v526, %v555
  %v575 = vsub.f32 %v527, %v557
  %v576 = vsub.f32 %v528, %v559
  %v577 = vsub.f32 %v529, %v561
  %v578 = vmul.f32 %v562, 1.442695
  %v579 = vpow.pop %v578
  %v580 = vmul.f32 %v563, 1.442695
  %v581 = vpow.pop %v580
  %v582 = vmul.f32 %v564, 1.442695
  %v583 = vpow.pop %v582
  %v584 = vmul.f32 %v565, 1.442695
  %v585 = vpow.pop %v584
  %v586 = vmul.f32 %v566, 1.442695
  %v587 = vpow.pop %v586
  %v588 = vmul.f32 %v567, 1.442695
  %v589 = vpow.pop %v588
  %v590 = vmul.f32 %v568, 1.442695
  %v591 = vpow.pop %v590
  %v592 = vmul.f32 %v569, 1.442695
  %v593 = vpow.pop %v592
  %v594 = vmul.f32 %v570, 1.442695
  %v595 = vpow.pop %v594
  %v596 = vmul.f32 %v571, 1.442695
  %v597 = vpow.pop %v596
  %v598 = vmul.f32 %v572, 1.442695
  %v599 = vpow.pop %v598
  %v600 = vmul.f32 %v573, 1.442695
  %v601 = vpow.pop %v600
  %v602 = vmul.f32 %v574, 1.442695
  %v603 = vpow.pop %v602
  %v604 = vmul.f32 %v575, 1.442695
  %v605 = vpow.pop %v604
  %v606 = vmul.f32 %v576, 1.442695
  %v607 = vpow.pop %v606
  %v608 = vmul.f32 %v577, 1.442695
  %v609 = vpow.pop %v608
  %610 = vadd.xlane.f32.xlu0 %v579
  %v611 = vpop.xlane.xlu0 %610
  %612 = vadd.xlane.f32.xlu0 %v581
  %v613 = vpop.xlane.xlu0 %612
  %614 = vadd.xlane.f32.xlu0 %v583
  %v615 = vpop.xlane.xlu0 %614
  %616 = vadd.xlane.f32.xlu0 %v585
  %v617 = vpop.xlane.xlu0 %616
  %618 = vadd.xlane.f32.xlu0 %v587
  %v619 = vpop.xlane.xlu0 %618
  %620 = vadd.xlane.f32.xlu0 %v589
  %v621 = vpop.xlane.xlu0 %620
  %622 = vadd.xlane.f32.xlu0 %v591
  %v623 = vpop.xlane.xlu0 %622
  %624 = vadd.xlane.f32.xlu0 %v593
  %v625 = vpop.xlane.xlu0 %624
  %626 = vadd.xlane.f32.xlu0 %v595
  %v627 = vpop.xlane.xlu0 %626
  %628 = vadd.xlane.f32.xlu0 %v597
  %v629 = vpop.xlane.xlu0 %628
  %630 = vadd.xlane.f32.xlu0 %v599
  %v631 = vpop.xlane.xlu0 %630
  %632 = vadd.xlane.f32.xlu0 %v601
  %v633 = vpop.xlane.xlu0 %632
  %634 = vadd.xlane.f32.xlu0 %v603
  %v635 = vpop.xlane.xlu0 %634
  %636 = vadd.xlane.f32.xlu0 %v605
  %v637 = vpop.xlane.xlu0 %636
  %638 = vadd.xlane.f32.xlu0 %v607
  %v639 = vpop.xlane.xlu0 %638
  %640 = vadd.xlane.f32.xlu0 %v609
  %v641 = vpop.xlane.xlu0 %640
  %v642 = vrcp.pop %v611
  %v643 = vrcp.pop %v613
  %v644 = vrcp.pop %v615
  %v645 = vrcp.pop %v617
  %v646 = vrcp.pop %v619
  %v647 = vrcp.pop %v621
  %v648 = vrcp.pop %v623
  %v649 = vrcp.pop %v625
  %v650 = vrcp.pop %v627
  %v651 = vrcp.pop %v629
  %v652 = vrcp.pop %v631
  %v653 = vrcp.pop %v633
  %v654 = vrcp.pop %v635
  %v655 = vrcp.pop %v637
  %v656 = vrcp.pop %v639
  %v657 = vrcp.pop %v641
  %v658 = vmul.f32 %v579, %v642
  %v659 = vmul.f32 %v581, %v643
  %v660 = vmul.f32 %v583, %v644
  %v661 = vmul.f32 %v585, %v645
  %v662 = vmul.f32 %v587, %v646
  %v663 = vmul.f32 %v589, %v647
  %v664 = vmul.f32 %v591, %v648
  %v665 = vmul.f32 %v593, %v649
  %v666 = vmul.f32 %v595, %v650
  %v667 = vmul.f32 %v597, %v651
  %v668 = vmul.f32 %v599, %v652
  %v669 = vmul.f32 %v601, %v653
  %v670 = vmul.f32 %v603, %v654
  %v671 = vmul.f32 %v605, %v655
  %v672 = vmul.f32 %v607, %v656
  %v673 = vmul.f32 %v609, %v657
  %v674 = vpack.c.bf16 %v659, %v658
  %v675 = vpack.c.bf16 %v661, %v660
  %v676 = vpack.c.bf16 %v663, %v662
  %v677 = vpack.c.bf16 %v665, %v664
  %v678 = vpack.c.bf16 %v667, %v666
  %v679 = vpack.c.bf16 %v669, %v668
  %v680 = vpack.c.bf16 %v671, %v670
  %v681 = vpack.c.bf16 %v673, %v672
  %v682 = vpack.c.bf16 %v181, %v178
  %v683 = vpack.c.bf16 %v189, %v186
  %v684 = vpack.c.bf16 %v197, %v194
  %v685 = vpack.c.bf16 %v205, %v202
  %v686 = vpack.c.bf16 %v213, %v210
  %v687 = vpack.c.bf16 %v221, %v218
  %v688 = vpack.c.bf16 %v229, %v226
  %v689 = vpack.c.bf16 %v237, %v234
  %690 = vmatprep.subr.bf16.mxu0 0
  %691 = vmatpush1.bf16.msra.mxu0 %v682
  %692 = vmatprep.subr.bf16.mxu0 0
  %693 = vmatpush1.bf16.msra.mxu0 %v683
  %694 = vmatprep.subr.bf16.mxu0 0
  %695 = vmatpush1.bf16.msra.mxu0 %v684
  %696 = vmatprep.subr.bf16.mxu0 0
  %697 = vmatpush1.bf16.msra.mxu0 %v685
  %698 = vmatprep.subr.bf16.mxu0 0
  %699 = vmatpush1.bf16.msra.mxu0 %v686
  %700 = vmatprep.subr.bf16.mxu0 0
  %701 = vmatpush1.bf16.msra.mxu0 %v687
  %702 = vmatprep.subr.bf16.mxu0 0
  %703 = vmatpush1.bf16.msra.mxu0 %v688
  %704 = vmatprep.subr.bf16.mxu0 0
  %705 = vmatpush1.bf16.msra.mxu0 %v689
  %706 = vmatprep.subr.bf16.mxu0 0
  %707 = vmatpush1.bf16.msra.mxu0 0
  %708 = vmatprep.subr.bf16.mxu0 0
  %709 = vmatpush1.bf16.msra.mxu0 0
  %710 = vmatprep.subr.bf16.mxu0 0
  %711 = vmatpush1.bf16.msra.mxu0 0
  %712 = vmatprep.subr.bf16.mxu0 0
  %713 = vmatpush1.bf16.msra.mxu0 0
  %714 = vmatprep.subr.bf16.mxu0 0
  %715 = vmatpush1.bf16.msra.mxu0 0
  %716 = vmatprep.subr.bf16.mxu0 0
  %717 = vmatpush1.bf16.msra.mxu0 0
  %718 = vmatprep.subr.bf16.mxu0 0
  %719 = vmatpush1.bf16.msra.mxu0 0
  %720 = vmatprep.subr.bf16.mxu0 0
  %721 = vmatpush1.bf16.msra.mxu0 0
  %722 = vmatprep.mubr.bf16.mxu0 0
  %723 = vmatmul.mubr.bf16.gmra.mrb[0].mxu0 %v674
  %v724 = vpop.f32.mrb[0].mxu0
  %v725 = vadd.f32 0.0, %v724
  %v726 = vpop.f32.mrb[0].mxu0
  %v727 = vpop.f32.mrb[0].mxu0
  %v728 = vadd.f32 0.0, %v727
  %v729 = vpop.f32.mrb[0].mxu0
  %730 = vmatprep.mubr.bf16.mxu0 0
  %731 = vmatmul.mubr.bf16.gmra.mrb[0].mxu0 %v675
  %v732 = vpop.f32.mrb[0].mxu0
  %v733 = vadd.f32 0.0, %v732
  %v734 = vpop.f32.mrb[0].mxu0
  %v735 = vpop.f32.mrb[0].mxu0
  %v736 = vadd.f32 0.0, %v735
  %v737 = vpop.f32.mrb[0].mxu0
  %738 = vmatprep.mubr.bf16.mxu0 0
  %739 = vmatmul.mubr.bf16.gmra.mrb[0].mxu0 %v676
  %v740 = vpop.f32.mrb[0].mxu0
  %v741 = vadd.f32 0.0, %v740
  %v742 = vpop.f32.mrb[0].mxu0
  %v743 = vpop.f32.mrb[0].mxu0
  %v744 = vadd.f32 0.0, %v743
  %v745 = vpop.f32.mrb[0].mxu0
  %746 = vmatprep.mubr.bf16.mxu0 0
  %747 = vmatmul.mubr.bf16.gmra.mrb[0].mxu0 %v677
  %v748 = vpop.f32.mrb[0].mxu0
  %v749 = vadd.f32 0.0, %v748
  %v750 = vpop.f32.mrb[0].mxu0
  %v751 = vpop.f32.mrb[0].mxu0
  %v752 = vadd.f32 0.0, %v751
  %v753 = vpop.f32.mrb[0].mxu0
  %754 = vmatprep.mubr.bf16.mxu0 0
  %755 = vmatmul.mubr.bf16.gmra.mrb[0].mxu0 %v678
  %v756 = vpop.f32.mrb[0].mxu0
  %v757 = vadd.f32 0.0, %v756
  %v758 = vpop.f32.mrb[0].mxu0
  %v759 = vpop.f32.mrb[0].mxu0
  %v760 = vadd.f32 0.0, %v759
  %v761 = vpop.f32.mrb[0].mxu0
  %762 = vmatprep.mubr.bf16.mxu0 0
  %763 = vmatmul.mubr.bf16.gmra.mrb[0].mxu0 %v679
  %v764 = vpop.f32.mrb[0].mxu0
  %v765 = vadd.f32 0.0, %v764
  %v766 = vpop.f32.mrb[0].mxu0
  %v767 = vpop.f32.mrb[0].mxu0
  %v768 = vadd.f32 0.0, %v767
  %v769 = vpop.f32.mrb[0].mxu0
  %770 = vmatprep.mubr.bf16.mxu0 0
  %771 = vmatmul.mubr.bf16.gmra.mrb[0].mxu0 %v680
  %v772 = vpop.f32.mrb[0].mxu0
  %v773 = vadd.f32 0.0, %v772
  %v774 = vpop.f32.mrb[0].mxu0
  %v775 = vpop.f32.mrb[0].mxu0
  %v776 = vadd.f32 0.0, %v775
  %v777 = vpop.f32.mrb[0].mxu0
  %778 = vmatprep.mubr.bf16.mxu0 0
  %779 = vmatmul.mubr.bf16.gmra.mrb[0].mxu0 %v681
  %v780 = vpop.f32.mrb[0].mxu0
  %v781 = vadd.f32 0.0, %v780
  %v782 = vpop.f32.mrb[0].mxu0
  %v783 = vpop.f32.mrb[0].mxu0
  %v784 = vadd.f32 0.0, %v783
  %v785 = vpop.f32.mrb[0].mxu0
  %786 = vdwg.mxu0
  %vm787 = vcmp.gt.f32.partialorder %v725, 0.0
  %vm788 = vcmp.gt.f32.partialorder %v728, 0.0
  %vm789 = vcmp.gt.f32.partialorder %v733, 0.0
  %vm790 = vcmp.gt.f32.partialorder %v736, 0.0
  %vm791 = vcmp.gt.f32.partialorder %v741, 0.0
  %vm792 = vcmp.gt.f32.partialorder %v744, 0.0
  %vm793 = vcmp.gt.f32.partialorder %v749, 0.0
  %vm794 = vcmp.gt.f32.partialorder %v752, 0.0
  %vm795 = vcmp.gt.f32.partialorder %v757, 0.0
  %vm796 = vcmp.gt.f32.partialorder %v760, 0.0
  %vm797 = vcmp.gt.f32.partialorder %v765, 0.0
  %vm798 = vcmp.gt.f32.partialorder %v768, 0.0
  %vm799 = vcmp.gt.f32.partialorder %v773, 0.0
  %vm800 = vcmp.gt.f32.partialorder %v776, 0.0
  %vm801 = vcmp.gt.f32.partialorder %v781, 0.0
  %vm802 = vcmp.gt.f32.partialorder %v784, 0.0
  %v803 = vmin.f32 %v725, 0.0
  %v804 = vmin.f32 %v728, 0.0
  %v805 = vmin.f32 %v733, 0.0
  %v806 = vmin.f32 %v736, 0.0
  %v807 = vmin.f32 %v741, 0.0
  %v808 = vmin.f32 %v744, 0.0
  %v809 = vmin.f32 %v749, 0.0
  %v810 = vmin.f32 %v752, 0.0
  %v811 = vmin.f32 %v757, 0.0
  %v812 = vmin.f32 %v760, 0.0
  %v813 = vmin.f32 %v765, 0.0
  %v814 = vmin.f32 %v768, 0.0
  %v815 = vmin.f32 %v773, 0.0
  %v816 = vmin.f32 %v776, 0.0
  %v817 = vmin.f32 %v781, 0.0
  %v818 = vmin.f32 %v784, 0.0
  %v819 = vmul.f32 %v803, 1.442695
  %v820 = vpow.pop %v819
  %v821 = vmul.f32 %v804, 1.442695
  %v822 = vpow.pop %v821
  %v823 = vmul.f32 %v805, 1.442695
  %v824 = vpow.pop %v823
  %v825 = vmul.f32 %v806, 1.442695
  %v826 = vpow.pop %v825
  %v827 = vmul.f32 %v807, 1.442695
  %v828 = vpow.pop %v827
  %v829 = vmul.f32 %v808, 1.442695
  %v830 = vpow.pop %v829
  %v831 = vmul.f32 %v809, 1.442695
  %v832 = vpow.pop %v831
  %v833 = vmul.f32 %v810, 1.442695
  %v834 = vpow.pop %v833
  %v835 = vmul.f32 %v811, 1.442695
  %v836 = vpow.pop %v835
  %v837 = vmul.f32 %v812, 1.442695
  %v838 = vpow.pop %v837
  %v839 = vmul.f32 %v813, 1.442695
  %v840 = vpow.pop %v839
  %v841 = vmul.f32 %v814, 1.442695
  %v842 = vpow.pop %v841
  %v843 = vmul.f32 %v815, 1.442695
  %v844 = vpow.pop %v843
  %v845 = vmul.f32 %v816, 1.442695
  %v846 = vpow.pop %v845
  %v847 = vmul.f32 %v817, 1.442695
  %v848 = vpow.pop %v847
  %v849 = vmul.f32 %v818, 1.442695
  %v850 = vpow.pop %v849
  %v851 = vsub.f32 %v820, 1.0
  %v852 = vsub.f32 %v822, 1.0
  %v853 = vsub.f32 %v824, 1.0
  %v854 = vsub.f32 %v826, 1.0
  %v855 = vsub.f32 %v828, 1.0
  %v856 = vsub.f32 %v830, 1.0
  %v857 = vsub.f32 %v832, 1.0
  %v858 = vsub.f32 %v834, 1.0
  %v859 = vsub.f32 %v836, 1.0
  %v860 = vsub.f32 %v838, 1.0
  %v861 = vsub.f32 %v840, 1.0
  %v862 = vsub.f32 %v842, 1.0
  %v863 = vsub.f32 %v844, 1.0
  %v864 = vsub.f32 %v846, 1.0
  %v865 = vsub.f32 %v848, 1.0
  %v866 = vsub.f32 %v850, 1.0
  %v867 = vsel %vm787, %v725, %v851
  %v868 = vsel %vm788, %v728, %v852
  %v869 = vsel %vm789, %v733, %v853
  %v870 = vsel %vm790, %v736, %v854
  %v871 = vsel %vm791, %v741, %v855
  %v872 = vsel %vm792, %v744, %v856
  %v873 = vsel %vm793, %v749, %v857
  %v874 = vsel %vm794, %v752, %v858
  %v875 = vsel %vm795, %v757, %v859
  %v876 = vsel %vm796, %v760, %v860
  %v877 = vsel %vm797, %v765, %v861
  %v878 = vsel %vm798, %v768, %v862
  %v879 = vsel %vm799, %v773, %v863
  %v880 = vsel %vm800, %v776, %v864
  %v881 = vsel %vm801, %v781, %v865
  %v882 = vsel %vm802, %v784, %v866
  %v883 = vpack.c.bf16 %v868, %v867
  %v884 = vpack.c.bf16 %v870, %v869
  %v885 = vpack.c.bf16 %v872, %v871
  %v886 = vpack.c.bf16 %v874, %v873
  %v887 = vpack.c.bf16 %v876, %v875
  %v888 = vpack.c.bf16 %v878, %v877
  %v889 = vpack.c.bf16 %v880, %v879
  %v890 = vpack.c.bf16 %v882, %v881
  %v891 = vld [vmem:[%s6] sm:$0xff]
  %v892 = vld [vmem:[%s6 + $0x8] sm:$0xff]
  %v893 = vld [vmem:[%s6 + $0x10] sm:$0xff]
  %v894 = vld [vmem:[%s6 + $0x18] sm:$0xff]
  %v895 = vld [vmem:[%s6 + $0x20] sm:$0xff]
  %v896 = vld [vmem:[%s6 + $0x28] sm:$0xff]
  %v897 = vld [vmem:[%s6 + $0x30] sm:$0xff]
  %v898 = vld [vmem:[%s6 + $0x38] sm:$0xff]
  %v899 = vld [vmem:[%s6 + $0x40] sm:$0xff]
  %v900 = vld [vmem:[%s6 + $0x48] sm:$0xff]
  %v901 = vld [vmem:[%s6 + $0x50] sm:$0xff]
  %v902 = vld [vmem:[%s6 + $0x58] sm:$0xff]
  %v903 = vld [vmem:[%s6 + $0x60] sm:$0xff]
  %v904 = vld [vmem:[%s6 + $0x68] sm:$0xff]
  %v905 = vld [vmem:[%s6 + $0x70] sm:$0xff]
  %v906 = vld [vmem:[%s6 + $0x78] sm:$0xff]
  %v907 = vpack.c.bf16 %v892, %v891
  %v908 = vpack.c.bf16 %v894, %v893
  %v909 = vpack.c.bf16 %v896, %v895
  %v910 = vpack.c.bf16 %v898, %v897
  %v911 = vpack.c.bf16 %v900, %v899
  %v912 = vpack.c.bf16 %v902, %v901
  %v913 = vpack.c.bf16 %v904, %v903
  %v914 = vpack.c.bf16 %v906, %v905
  %915 = vmatprep.subr.bf16.mxu0 0
  %916 = vmatpush1.bf16.msra.mxu0 %v907
  %917 = vmatprep.subr.bf16.mxu0 0
  %918 = vmatpush1.bf16.msra.mxu0 %v908
  %919 = vmatprep.subr.bf16.mxu0 0
  %920 = vmatpush1.bf16.msra.mxu0 %v909
  %921 = vmatprep.subr.bf16.mxu0 0
  %922 = vmatpush1.bf16.msra.mxu0 %v910
  %923 = vmatprep.subr.bf16.mxu0 0
  %924 = vmatpush1.bf16.msra.mxu0 %v911
  %925 = vmatprep.subr.bf16.mxu0 0
  %926 = vmatpush1.bf16.msra.mxu0 %v912
  %927 = vmatprep.subr.bf16.mxu0 0
  %928 = vmatpush1.bf16.msra.mxu0 %v913
  %929 = vmatprep.subr.bf16.mxu0 0
  %930 = vmatpush1.bf16.msra.mxu0 %v914
  %931 = vmatprep.subr.bf16.mxu0 0
  %932 = vmatpush1.bf16.msra.mxu0 0
  %933 = vmatprep.subr.bf16.mxu0 0
  %934 = vmatpush1.bf16.msra.mxu0 0
  %935 = vmatprep.subr.bf16.mxu0 0
  %936 = vmatpush1.bf16.msra.mxu0 0
  %937 = vmatprep.subr.bf16.mxu0 0
  %938 = vmatpush1.bf16.msra.mxu0 0
  %939 = vmatprep.subr.bf16.mxu0 0
  %940 = vmatpush1.bf16.msra.mxu0 0
  %941 = vmatprep.subr.bf16.mxu0 0
  %942 = vmatpush1.bf16.msra.mxu0 0
  %943 = vmatprep.subr.bf16.mxu0 0
  %944 = vmatpush1.bf16.msra.mxu0 0
  %945 = vmatprep.subr.bf16.mxu0 0
  %946 = vmatpush1.bf16.msra.mxu0 0
  %947 = vmatprep.mubr.bf16.mxu0 0
  %948 = vmatmul.mubr.bf16.gmra.mrb[0].mxu0 %v883
  %v949 = vpop.f32.mrb[0].mxu0
  %v950 = vadd.f32 0.0, %v949
  %v951 = vpop.f32.mrb[0].mxu0
  %v952 = vpop.f32.mrb[0].mxu0
  %v953 = vadd.f32 0.0, %v952
  %v954 = vpop.f32.mrb[0].mxu0
  %955 = vmatprep.mubr.bf16.mxu0 0
  %956 = vmatmul.mubr.bf16.gmra.mrb[0].mxu0 %v884
  %v957 = vpop.f32.mrb[0].mxu0
  %v958 = vadd.f32 0.0, %v957
  %v959 = vpop.f32.mrb[0].mxu0
  %v960 = vpop.f32.mrb[0].mxu0
  %v961 = vadd.f32 0.0, %v960
  %v962 = vpop.f32.mrb[0].mxu0
  %963 = vmatprep.mubr.bf16.mxu0 0
  %964 = vmatmul.mubr.bf16.gmra.mrb[0].mxu0 %v885
  %v965 = vpop.f32.mrb[0].mxu0
  %v966 = vadd.f32 0.0, %v965
  %v967 = vpop.f32.mrb[0].mxu0
  %v968 = vpop.f32.mrb[0].mxu0
  %v969 = vadd.f32 0.0, %v968
  %v970 = vpop.f32.mrb[0].mxu0
  %971 = vmatprep.mubr.bf16.mxu0 0
  %972 = vmatmul.mubr.bf16.gmra.mrb[0].mxu0 %v886
  %v973 = vpop.f32.mrb[0].mxu0
  %v974 = vadd.f32 0.0, %v973
  %v975 = vpop.f32.mrb[0].mxu0
  %v976 = vpop.f32.mrb[0].mxu0
  %v977 = vadd.f32 0.0, %v976
  %v978 = vpop.f32.mrb[0].mxu0
  %979 = vmatprep.mubr.bf16.mxu0 0
  %980 = vmatmul.mubr.bf16.gmra.mrb[0].mxu0 %v887
  %v981 = vpop.f32.mrb[0].mxu0
  %v982 = vadd.f32 0.0, %v981
  %v983 = vpop.f32.mrb[0].mxu0
  %v984 = vpop.f32.mrb[0].mxu0
  %v985 = vadd.f32 0.0, %v984
  %v986 = vpop.f32.mrb[0].mxu0
  %987 = vmatprep.mubr.bf16.mxu0 0
  %988 = vmatmul.mubr.bf16.gmra.mrb[0].mxu0 %v888
  %v989 = vpop.f32.mrb[0].mxu0
  %v990 = vadd.f32 0.0, %v989
  %v991 = vpop.f32.mrb[0].mxu0
  %v992 = vpop.f32.mrb[0].mxu0
  %v993 = vadd.f32 0.0, %v992
  %v994 = vpop.f32.mrb[0].mxu0
  %995 = vmatprep.mubr.bf16.mxu0 0
  %996 = vmatmul.mubr.bf16.gmra.mrb[0].mxu0 %v889
  %v997 = vpop.f32.mrb[0].mxu0
  %v998 = vadd.f32 0.0, %v997
  %v999 = vpop.f32.mrb[0].mxu0
  %v1000 = vpop.f32.mrb[0].mxu0
  %v1001 = vadd.f32 0.0, %v1000
  %v1002 = vpop.f32.mrb[0].mxu0
  %1003 = vmatprep.mubr.bf16.mxu0 0
  %1004 = vmatmul.mubr.bf16.gmra.mrb[0].mxu0 %v890
  %v1005 = vpop.f32.mrb[0].mxu0
  %v1006 = vadd.f32 0.0, %v1005
  %v1007 = vpop.f32.mrb[0].mxu0
  %v1008 = vpop.f32.mrb[0].mxu0
  %v1009 = vadd.f32 0.0, %v1008
  %v1010 = vpop.f32.mrb[0].mxu0
  %1011 = vdwg.mxu0
  %v1012 = vld [vmem:[%s7] sm:$0x1]
  %v1013 = vld [vmem:[%s8] sm:$0x1]
  %v1015 = vlaneseq
  %v1016 = vshrl.u32 %v1015, 7
  %v1017 = vsub.s32 0, %v1016
  %v1018 = vrot.slane %v1012, %v1017
  %v1020 = vmul.f32 %v950, %v1018
  %v1021 = vmul.f32 %v953, %v1018
  %v1022 = vmul.f32 %v958, %v1018
  %v1023 = vmul.f32 %v961, %v1018
  %v1024 = vmul.f32 %v966, %v1018
  %v1025 = vmul.f32 %v969, %v1018
  %v1026 = vmul.f32 %v974, %v1018
  %v1027 = vmul.f32 %v977, %v1018
  %v1028 = vmul.f32 %v982, %v1018
  %v1029 = vmul.f32 %v985, %v1018
  %v1030 = vmul.f32 %v990, %v1018
  %v1031 = vmul.f32 %v993, %v1018
  %v1032 = vmul.f32 %v998, %v1018
  %v1033 = vmul.f32 %v1001, %v1018
  %v1034 = vmul.f32 %v1006, %v1018
  %v1035 = vmul.f32 %v1009, %v1018
  %1036 = vadd.xlane.f32.xlu0 %v1020
  %v1037 = vpop.xlane.xlu0 %1036
  %1038 = vadd.xlane.f32.xlu0 %v1021
  %v1039 = vpop.xlane.xlu0 %1038
  %1040 = vadd.xlane.f32.xlu0 %v1022
  %v1041 = vpop.xlane.xlu0 %1040
  %1042 = vadd.xlane.f32.xlu0 %v1023
  %v1043 = vpop.xlane.xlu0 %1042
  %1044 = vadd.xlane.f32.xlu0 %v1024
  %v1045 = vpop.xlane.xlu0 %1044
  %1046 = vadd.xlane.f32.xlu0 %v1025
  %v1047 = vpop.xlane.xlu0 %1046
  %1048 = vadd.xlane.f32.xlu0 %v1026
  %v1049 = vpop.xlane.xlu0 %1048
  %1050 = vadd.xlane.f32.xlu0 %v1027
  %v1051 = vpop.xlane.xlu0 %1050
  %1052 = vadd.xlane.f32.xlu0 %v1028
  %v1053 = vpop.xlane.xlu0 %1052
  %1054 = vadd.xlane.f32.xlu0 %v1029
  %v1055 = vpop.xlane.xlu0 %1054
  %1056 = vadd.xlane.f32.xlu0 %v1030
  %v1057 = vpop.xlane.xlu0 %1056
  %1058 = vadd.xlane.f32.xlu0 %v1031
  %v1059 = vpop.xlane.xlu0 %1058
  %1060 = vadd.xlane.f32.xlu0 %v1032
  %v1061 = vpop.xlane.xlu0 %1060
  %1062 = vadd.xlane.f32.xlu0 %v1033
  %v1063 = vpop.xlane.xlu0 %1062
  %1064 = vadd.xlane.f32.xlu0 %v1034
  %v1065 = vpop.xlane.xlu0 %1064
  %1066 = vadd.xlane.f32.xlu0 %v1035
  %v1067 = vpop.xlane.xlu0 %1066
  %1068 = vmatprep.subr.mxu0 0.0
  %1069 = vmatpush1.xpose.msra.mxu0 %v950
  %1070 = vmatprep.subr.mxu0 0.0
  %1071 = vmatpush1.xpose.msra.mxu0 %v953
  %1072 = vmatprep.subr.mxu0 0.0
  %1073 = vmatpush1.xpose.msra.mxu0 %v958
  %1074 = vmatprep.subr.mxu0 0.0
  %1075 = vmatpush1.xpose.msra.mxu0 %v961
  %1076 = vmatprep.subr.mxu0 0.0
  %1077 = vmatpush1.xpose.msra.mxu0 %v966
  %1078 = vmatprep.subr.mxu0 0.0
  %1079 = vmatpush1.xpose.msra.mxu0 %v969
  %1080 = vmatprep.subr.mxu0 0.0
  %1081 = vmatpush1.xpose.msra.mxu0 %v974
  %1082 = vmatprep.subr.mxu0 0.0
  %1083 = vmatpush1.xpose.msra.mxu0 %v977
  %1084 = vmatprep.subr.mxu0 0.0
  %1085 = vmatpush1.xpose.msra.mxu0 %v982
  %1086 = vmatprep.subr.mxu0 0.0
  %1087 = vmatpush1.xpose.msra.mxu0 %v985
  %1088 = vmatprep.subr.mxu0 0.0
  %1089 = vmatpush1.xpose.msra.mxu0 %v990
  %1090 = vmatprep.subr.mxu0 0.0
  %1091 = vmatpush1.xpose.msra.mxu0 %v993
  %1092 = vmatprep.subr.mxu0 0.0
  %1093 = vmatpush1.xpose.msra.mxu0 %v998
  %1094 = vmatprep.subr.mxu0 0.0
  %1095 = vmatpush1.xpose.msra.mxu0 %v1001
  %1096 = vmatprep.subr.mxu0 0.0
  %1097 = vmatpush1.xpose.msra.mxu0 %v1006
  %1098 = vmatprep.subr.mxu0 0.0
  %1099 = vmatpush1.xpose.msra.mxu0 %v1009
  %1100 = vmatprep.subr.mxu0 0.0
  %1101 = vmatpush1.xpose.msra.mxu0 0.0
  %1102 = vmatprep.subr.mxu0 0.0
  %1103 = vmatpush1.xpose.msra.mxu0 0.0
  %1104 = vmatprep.subr.mxu0 0.0
  %1105 = vmatpush1.xpose.msra.mxu0 0.0
  %1106 = vmatprep.subr.mxu0 0.0
  %1107 = vmatpush1.xpose.msra.mxu0 0.0
  %1108 = vmatprep.subr.mxu0 0.0
  %1109 = vmatpush1.xpose.msra.mxu0 0.0
  %1110 = vmatprep.subr.mxu0 0.0
  %1111 = vmatpush1.xpose.msra.mxu0 0.0
  %1112 = vmatprep.subr.mxu0 0.0
  %1113 = vmatpush1.xpose.msra.mxu0 0.0
  %1114 = vmatprep.subr.mxu0 0.0
  %1115 = vmatpush1.xpose.msra.mxu0 0.0
  %1116 = vmatprep.subr.mxu0 0.0
  %1117 = vmatpush1.xpose.msra.mxu0 0.0
  %1118 = vmatprep.subr.mxu0 0.0
  %1119 = vmatpush1.xpose.msra.mxu0 0.0
  %1120 = vmatprep.subr.mxu0 0.0
  %1121 = vmatpush1.xpose.msra.mxu0 0.0
  %1122 = vmatprep.subr.mxu0 0.0
  %1123 = vmatpush1.xpose.msra.mxu0 0.0
  %1124 = vmatprep.subr.mxu0 0.0
  %1125 = vmatpush1.xpose.msra.mxu0 0.0
  %1126 = vmatprep.subr.mxu0 0.0
  %1127 = vmatpush1.xpose.msra.mxu0 0.0
  %1128 = vmatprep.subr.mxu0 0.0
  %1129 = vmatpush1.xpose.msra.mxu0 0.0
  %1130 = vmatprep.subr.mxu0 0.0
  %1131 = vmatpush1.xpose.msra.mxu0 0.0
  %1132 = vmatprep.mubr.f32.mxu0 0.0
  %1133 = vmatmul.mubr.f32.gmra.mrb[0].mxu0 %v1013
  %v1134 = vpop.f32.mrb[0].mxu0
  %v1135 = vadd.f32 0.0, %v1134
  %v1136 = vpop.f32.mrb[0].mxu0
  %1137 = vdwg.mxu0
  %v1138 = vlaneseq
  %v1139 = vshrl.u32 %v1138, 7
  %v1140 = vsub.s32 0, %v1139
  %v1141 = vrot.slane %v1135, %v1140
  %v1142 = vadd.f32 %v1037, %v1141
  %v1143 = vadd.f32 %v1039, %v1141
  %v1144 = vadd.f32 %v1041, %v1141
  %v1145 = vadd.f32 %v1043, %v1141
  %v1146 = vadd.f32 %v1045, %v1141
  %v1147 = vadd.f32 %v1047, %v1141
  %v1148 = vadd.f32 %v1049, %v1141
  %v1149 = vadd.f32 %v1051, %v1141
  %v1150 = vadd.f32 %v1053, %v1141
  %v1151 = vadd.f32 %v1055, %v1141
  %v1152 = vadd.f32 %v1057, %v1141
  %v1153 = vadd.f32 %v1059, %v1141
  %v1154 = vadd.f32 %v1061, %v1141
  %v1155 = vadd.f32 %v1063, %v1141
  %v1156 = vadd.f32 %v1065, %v1141
  %v1157 = vadd.f32 %v1067, %v1141
  %v1158 = vmul.f32 %v1142, %v72
  %v1159 = vmul.f32 %v1143, %v73
  %v1160 = vmul.f32 %v1144, %v74
  %v1161 = vmul.f32 %v1145, %v75
  %v1162 = vmul.f32 %v1146, %v76
  %v1163 = vmul.f32 %v1147, %v77
  %v1164 = vmul.f32 %v1148, %v78
  %v1165 = vmul.f32 %v1149, %v79
  %v1166 = vmul.f32 %v1150, %v80
  %v1167 = vmul.f32 %v1151, %v81
  %v1168 = vmul.f32 %v1152, %v82
  %v1169 = vmul.f32 %v1153, %v83
  %v1170 = vmul.f32 %v1154, %v84
  %v1171 = vmul.f32 %v1155, %v85
  %v1172 = vmul.f32 %v1156, %v86
  %v1173 = vmul.f32 %v1157, %v87
  %vm1174 = vcmp.gt.f32.partialorder %v1158, 0.0
  %vm1175 = vcmp.gt.f32.partialorder %v1159, 0.0
  %vm1176 = vcmp.gt.f32.partialorder %v1160, 0.0
  %vm1177 = vcmp.gt.f32.partialorder %v1161, 0.0
  %vm1178 = vcmp.gt.f32.partialorder %v1162, 0.0
  %vm1179 = vcmp.gt.f32.partialorder %v1163, 0.0
  %vm1180 = vcmp.gt.f32.partialorder %v1164, 0.0
  %vm1181 = vcmp.gt.f32.partialorder %v1165, 0.0
  %vm1182 = vcmp.gt.f32.partialorder %v1166, 0.0
  %vm1183 = vcmp.gt.f32.partialorder %v1167, 0.0
  %vm1184 = vcmp.gt.f32.partialorder %v1168, 0.0
  %vm1185 = vcmp.gt.f32.partialorder %v1169, 0.0
  %vm1186 = vcmp.gt.f32.partialorder %v1170, 0.0
  %vm1187 = vcmp.gt.f32.partialorder %v1171, 0.0
  %vm1188 = vcmp.gt.f32.partialorder %v1172, 0.0
  %vm1189 = vcmp.gt.f32.partialorder %v1173, 0.0
  %v1190 = vmul.f32 %v1158, 0.2
  %v1191 = vmul.f32 %v1159, 0.2
  %v1192 = vmul.f32 %v1160, 0.2
  %v1193 = vmul.f32 %v1161, 0.2
  %v1194 = vmul.f32 %v1162, 0.2
  %v1195 = vmul.f32 %v1163, 0.2
  %v1196 = vmul.f32 %v1164, 0.2
  %v1197 = vmul.f32 %v1165, 0.2
  %v1198 = vmul.f32 %v1166, 0.2
  %v1199 = vmul.f32 %v1167, 0.2
  %v1200 = vmul.f32 %v1168, 0.2
  %v1201 = vmul.f32 %v1169, 0.2
  %v1202 = vmul.f32 %v1170, 0.2
  %v1203 = vmul.f32 %v1171, 0.2
  %v1204 = vmul.f32 %v1172, 0.2
  %v1205 = vmul.f32 %v1173, 0.2
  %v1206 = vsel %vm1174, %v1158, %v1190
  %v1207 = vsel %vm1175, %v1159, %v1191
  %v1208 = vsel %vm1176, %v1160, %v1192
  %v1209 = vsel %vm1177, %v1161, %v1193
  %v1210 = vsel %vm1178, %v1162, %v1194
  %v1211 = vsel %vm1179, %v1163, %v1195
  %v1212 = vsel %vm1180, %v1164, %v1196
  %v1213 = vsel %vm1181, %v1165, %v1197
  %v1214 = vsel %vm1182, %v1166, %v1198
  %v1215 = vsel %vm1183, %v1167, %v1199
  %v1216 = vsel %vm1184, %v1168, %v1200
  %v1217 = vsel %vm1185, %v1169, %v1201
  %v1218 = vsel %vm1186, %v1170, %v1202
  %v1219 = vsel %vm1187, %v1171, %v1203
  %v1220 = vsel %vm1188, %v1172, %v1204
  %v1221 = vsel %vm1189, %v1173, %v1205
  %v1222 = vsel %vm498, %v1206, -9e+15
  %v1223 = vsel %vm499, %v1207, -9e+15
  %v1224 = vsel %vm500, %v1208, -9e+15
  %v1225 = vsel %vm501, %v1209, -9e+15
  %v1226 = vsel %vm502, %v1210, -9e+15
  %v1227 = vsel %vm503, %v1211, -9e+15
  %v1228 = vsel %vm504, %v1212, -9e+15
  %v1229 = vsel %vm505, %v1213, -9e+15
  %v1230 = vsel %vm506, %v1214, -9e+15
  %v1231 = vsel %vm507, %v1215, -9e+15
  %v1232 = vsel %vm508, %v1216, -9e+15
  %v1233 = vsel %vm509, %v1217, -9e+15
  %v1234 = vsel %vm510, %v1218, -9e+15
  %v1235 = vsel %vm511, %v1219, -9e+15
  %v1236 = vsel %vm512, %v1220, -9e+15
  %v1237 = vsel %vm513, %v1221, -9e+15
  %1238 = vmax.xlane.f32.xlu0 %v1222
  %v1239 = vpop.xlane.xlu0 %1238
  %1240 = vmax.xlane.f32.xlu0 %v1223
  %v1241 = vpop.xlane.xlu0 %1240
  %1242 = vmax.xlane.f32.xlu0 %v1224
  %v1243 = vpop.xlane.xlu0 %1242
  %1244 = vmax.xlane.f32.xlu0 %v1225
  %v1245 = vpop.xlane.xlu0 %1244
  %1246 = vmax.xlane.f32.xlu0 %v1226
  %v1247 = vpop.xlane.xlu0 %1246
  %1248 = vmax.xlane.f32.xlu0 %v1227
  %v1249 = vpop.xlane.xlu0 %1248
  %1250 = vmax.xlane.f32.xlu0 %v1228
  %v1251 = vpop.xlane.xlu0 %1250
  %1252 = vmax.xlane.f32.xlu0 %v1229
  %v1253 = vpop.xlane.xlu0 %1252
  %1254 = vmax.xlane.f32.xlu0 %v1230
  %v1255 = vpop.xlane.xlu0 %1254
  %1256 = vmax.xlane.f32.xlu0 %v1231
  %v1257 = vpop.xlane.xlu0 %1256
  %1258 = vmax.xlane.f32.xlu0 %v1232
  %v1259 = vpop.xlane.xlu0 %1258
  %1260 = vmax.xlane.f32.xlu0 %v1233
  %v1261 = vpop.xlane.xlu0 %1260
  %1262 = vmax.xlane.f32.xlu0 %v1234
  %v1263 = vpop.xlane.xlu0 %1262
  %1264 = vmax.xlane.f32.xlu0 %v1235
  %v1265 = vpop.xlane.xlu0 %1264
  %1266 = vmax.xlane.f32.xlu0 %v1236
  %v1267 = vpop.xlane.xlu0 %1266
  %1268 = vmax.xlane.f32.xlu0 %v1237
  %v1269 = vpop.xlane.xlu0 %1268
  %v1270 = vsub.f32 %v1222, %v1239
  %v1271 = vsub.f32 %v1223, %v1241
  %v1272 = vsub.f32 %v1224, %v1243
  %v1273 = vsub.f32 %v1225, %v1245
  %v1274 = vsub.f32 %v1226, %v1247
  %v1275 = vsub.f32 %v1227, %v1249
  %v1276 = vsub.f32 %v1228, %v1251
  %v1277 = vsub.f32 %v1229, %v1253
  %v1278 = vsub.f32 %v1230, %v1255
  %v1279 = vsub.f32 %v1231, %v1257
  %v1280 = vsub.f32 %v1232, %v1259
  %v1281 = vsub.f32 %v1233, %v1261
  %v1282 = vsub.f32 %v1234, %v1263
  %v1283 = vsub.f32 %v1235, %v1265
  %v1284 = vsub.f32 %v1236, %v1267
  %v1285 = vsub.f32 %v1237, %v1269
  %v1286 = vmul.f32 %v1270, 1.442695
  %v1287 = vpow.pop %v1286
  %v1288 = vmul.f32 %v1271, 1.442695
  %v1289 = vpow.pop %v1288
  %v1290 = vmul.f32 %v1272, 1.442695
  %v1291 = vpow.pop %v1290
  %v1292 = vmul.f32 %v1273, 1.442695
  %v1293 = vpow.pop %v1292
  %v1294 = vmul.f32 %v1274, 1.442695
  %v1295 = vpow.pop %v1294
  %v1296 = vmul.f32 %v1275, 1.442695
  %v1297 = vpow.pop %v1296
  %v1298 = vmul.f32 %v1276, 1.442695
  %v1299 = vpow.pop %v1298
  %v1300 = vmul.f32 %v1277, 1.442695
  %v1301 = vpow.pop %v1300
  %v1302 = vmul.f32 %v1278, 1.442695
  %v1303 = vpow.pop %v1302
  %v1304 = vmul.f32 %v1279, 1.442695
  %v1305 = vpow.pop %v1304
  %v1306 = vmul.f32 %v1280, 1.442695
  %v1307 = vpow.pop %v1306
  %v1308 = vmul.f32 %v1281, 1.442695
  %v1309 = vpow.pop %v1308
  %v1310 = vmul.f32 %v1282, 1.442695
  %v1311 = vpow.pop %v1310
  %v1312 = vmul.f32 %v1283, 1.442695
  %v1313 = vpow.pop %v1312
  %v1314 = vmul.f32 %v1284, 1.442695
  %v1315 = vpow.pop %v1314
  %v1316 = vmul.f32 %v1285, 1.442695
  %v1317 = vpow.pop %v1316
  %1318 = vadd.xlane.f32.xlu0 %v1287
  %v1319 = vpop.xlane.xlu0 %1318
  %1320 = vadd.xlane.f32.xlu0 %v1289
  %v1321 = vpop.xlane.xlu0 %1320
  %1322 = vadd.xlane.f32.xlu0 %v1291
  %v1323 = vpop.xlane.xlu0 %1322
  %1324 = vadd.xlane.f32.xlu0 %v1293
  %v1325 = vpop.xlane.xlu0 %1324
  %1326 = vadd.xlane.f32.xlu0 %v1295
  %v1327 = vpop.xlane.xlu0 %1326
  %1328 = vadd.xlane.f32.xlu0 %v1297
  %v1329 = vpop.xlane.xlu0 %1328
  %1330 = vadd.xlane.f32.xlu0 %v1299
  %v1331 = vpop.xlane.xlu0 %1330
  %1332 = vadd.xlane.f32.xlu0 %v1301
  %v1333 = vpop.xlane.xlu0 %1332
  %1334 = vadd.xlane.f32.xlu0 %v1303
  %v1335 = vpop.xlane.xlu0 %1334
  %1336 = vadd.xlane.f32.xlu0 %v1305
  %v1337 = vpop.xlane.xlu0 %1336
  %1338 = vadd.xlane.f32.xlu0 %v1307
  %v1339 = vpop.xlane.xlu0 %1338
  %1340 = vadd.xlane.f32.xlu0 %v1309
  %v1341 = vpop.xlane.xlu0 %1340
  %1342 = vadd.xlane.f32.xlu0 %v1311
  %v1343 = vpop.xlane.xlu0 %1342
  %1344 = vadd.xlane.f32.xlu0 %v1313
  %v1345 = vpop.xlane.xlu0 %1344
  %1346 = vadd.xlane.f32.xlu0 %v1315
  %v1347 = vpop.xlane.xlu0 %1346
  %1348 = vadd.xlane.f32.xlu0 %v1317
  %v1349 = vpop.xlane.xlu0 %1348
  %v1350 = vrcp.pop %v1319
  %v1351 = vrcp.pop %v1321
  %v1352 = vrcp.pop %v1323
  %v1353 = vrcp.pop %v1325
  %v1354 = vrcp.pop %v1327
  %v1355 = vrcp.pop %v1329
  %v1356 = vrcp.pop %v1331
  %v1357 = vrcp.pop %v1333
  %v1358 = vrcp.pop %v1335
  %v1359 = vrcp.pop %v1337
  %v1360 = vrcp.pop %v1339
  %v1361 = vrcp.pop %v1341
  %v1362 = vrcp.pop %v1343
  %v1363 = vrcp.pop %v1345
  %v1364 = vrcp.pop %v1347
  %v1365 = vrcp.pop %v1349
  %v1366 = vmul.f32 %v1287, %v1350
  %v1367 = vmul.f32 %v1289, %v1351
  %v1368 = vmul.f32 %v1291, %v1352
  %v1369 = vmul.f32 %v1293, %v1353
  %v1370 = vmul.f32 %v1295, %v1354
  %v1371 = vmul.f32 %v1297, %v1355
  %v1372 = vmul.f32 %v1299, %v1356
  %v1373 = vmul.f32 %v1301, %v1357
  %v1374 = vmul.f32 %v1303, %v1358
  %v1375 = vmul.f32 %v1305, %v1359
  %v1376 = vmul.f32 %v1307, %v1360
  %v1377 = vmul.f32 %v1309, %v1361
  %v1378 = vmul.f32 %v1311, %v1362
  %v1379 = vmul.f32 %v1313, %v1363
  %v1380 = vmul.f32 %v1315, %v1364
  %v1381 = vmul.f32 %v1317, %v1365
  %v1382 = vpack.c.bf16 %v1367, %v1366
  %v1383 = vpack.c.bf16 %v1369, %v1368
  %v1384 = vpack.c.bf16 %v1371, %v1370
  %v1385 = vpack.c.bf16 %v1373, %v1372
  %v1386 = vpack.c.bf16 %v1375, %v1374
  %v1387 = vpack.c.bf16 %v1377, %v1376
  %v1388 = vpack.c.bf16 %v1379, %v1378
  %v1389 = vpack.c.bf16 %v1381, %v1380
  %v1390 = vpack.c.bf16 %v953, %v950
  %v1391 = vpack.c.bf16 %v961, %v958
  %v1392 = vpack.c.bf16 %v969, %v966
  %v1393 = vpack.c.bf16 %v977, %v974
  %v1394 = vpack.c.bf16 %v985, %v982
  %v1395 = vpack.c.bf16 %v993, %v990
  %v1396 = vpack.c.bf16 %v1001, %v998
  %v1397 = vpack.c.bf16 %v1009, %v1006
  %1398 = vmatprep.subr.bf16.mxu0 0
  %1399 = vmatpush1.bf16.msra.mxu0 %v1390
  %1400 = vmatprep.subr.bf16.mxu0 0
  %1401 = vmatpush1.bf16.msra.mxu0 %v1391
  %1402 = vmatprep.subr.bf16.mxu0 0
  %1403 = vmatpush1.bf16.msra.mxu0 %v1392
  %1404 = vmatprep.subr.bf16.mxu0 0
  %1405 = vmatpush1.bf16.msra.mxu0 %v1393
  %1406 = vmatprep.subr.bf16.mxu0 0
  %1407 = vmatpush1.bf16.msra.mxu0 %v1394
  %1408 = vmatprep.subr.bf16.mxu0 0
  %1409 = vmatpush1.bf16.msra.mxu0 %v1395
  %1410 = vmatprep.subr.bf16.mxu0 0
  %1411 = vmatpush1.bf16.msra.mxu0 %v1396
  %1412 = vmatprep.subr.bf16.mxu0 0
  %1413 = vmatpush1.bf16.msra.mxu0 %v1397
  %1414 = vmatprep.subr.bf16.mxu0 0
  %1415 = vmatpush1.bf16.msra.mxu0 0
  %1416 = vmatprep.subr.bf16.mxu0 0
  %1417 = vmatpush1.bf16.msra.mxu0 0
  %1418 = vmatprep.subr.bf16.mxu0 0
  %1419 = vmatpush1.bf16.msra.mxu0 0
  %1420 = vmatprep.subr.bf16.mxu0 0
  %1421 = vmatpush1.bf16.msra.mxu0 0
  %1422 = vmatprep.subr.bf16.mxu0 0
  %1423 = vmatpush1.bf16.msra.mxu0 0
  %1424 = vmatprep.subr.bf16.mxu0 0
  %1425 = vmatpush1.bf16.msra.mxu0 0
  %1426 = vmatprep.subr.bf16.mxu0 0
  %1427 = vmatpush1.bf16.msra.mxu0 0
  %1428 = vmatprep.subr.bf16.mxu0 0
  %1429 = vmatpush1.bf16.msra.mxu0 0
  %1430 = vmatprep.mubr.bf16.mxu0 0
  %1431 = vmatmul.mubr.bf16.gmra.mrb[0].mxu0 %v1382
  %v1432 = vpop.f32.mrb[0].mxu0
  %v1433 = vadd.f32 0.0, %v1432
  %v1434 = vpop.f32.mrb[0].mxu0
  %v1435 = vpop.f32.mrb[0].mxu0
  %v1436 = vadd.f32 0.0, %v1435
  %v1437 = vpop.f32.mrb[0].mxu0
  %1438 = vmatprep.mubr.bf16.mxu0 0
  %1439 = vmatmul.mubr.bf16.gmra.mrb[0].mxu0 %v1383
  %v1440 = vpop.f32.mrb[0].mxu0
  %v1441 = vadd.f32 0.0, %v1440
  %v1442 = vpop.f32.mrb[0].mxu0
  %v1443 = vpop.f32.mrb[0].mxu0
  %v1444 = vadd.f32 0.0, %v1443
  %v1445 = vpop.f32.mrb[0].mxu0
  %1446 = vmatprep.mubr.bf16.mxu0 0
  %1447 = vmatmul.mubr.bf16.gmra.mrb[0].mxu0 %v1384
  %v1448 = vpop.f32.mrb[0].mxu0
  %v1449 = vadd.f32 0.0, %v1448
  %v1450 = vpop.f32.mrb[0].mxu0
  %v1451 = vpop.f32.mrb[0].mxu0
  %v1452 = vadd.f32 0.0, %v1451
  %v1453 = vpop.f32.mrb[0].mxu0
  %1454 = vmatprep.mubr.bf16.mxu0 0
  %1455 = vmatmul.mubr.bf16.gmra.mrb[0].mxu0 %v1385
  %v1456 = vpop.f32.mrb[0].mxu0
  %v1457 = vadd.f32 0.0, %v1456
  %v1458 = vpop.f32.mrb[0].mxu0
  %v1459 = vpop.f32.mrb[0].mxu0
  %v1460 = vadd.f32 0.0, %v1459
  %v1461 = vpop.f32.mrb[0].mxu0
  %1462 = vmatprep.mubr.bf16.mxu0 0
  %1463 = vmatmul.mubr.bf16.gmra.mrb[0].mxu0 %v1386
  %v1464 = vpop.f32.mrb[0].mxu0
  %v1465 = vadd.f32 0.0, %v1464
  %v1466 = vpop.f32.mrb[0].mxu0
  %v1467 = vpop.f32.mrb[0].mxu0
  %v1468 = vadd.f32 0.0, %v1467
  %v1469 = vpop.f32.mrb[0].mxu0
  %1470 = vmatprep.mubr.bf16.mxu0 0
  %1471 = vmatmul.mubr.bf16.gmra.mrb[0].mxu0 %v1387
  %v1472 = vpop.f32.mrb[0].mxu0
  %v1473 = vadd.f32 0.0, %v1472
  %v1474 = vpop.f32.mrb[0].mxu0
  %v1475 = vpop.f32.mrb[0].mxu0
  %v1476 = vadd.f32 0.0, %v1475
  %v1477 = vpop.f32.mrb[0].mxu0
  %1478 = vmatprep.mubr.bf16.mxu0 0
  %1479 = vmatmul.mubr.bf16.gmra.mrb[0].mxu0 %v1388
  %v1480 = vpop.f32.mrb[0].mxu0
  %v1481 = vadd.f32 0.0, %v1480
  %v1482 = vpop.f32.mrb[0].mxu0
  %v1483 = vpop.f32.mrb[0].mxu0
  %v1484 = vadd.f32 0.0, %v1483
  %v1485 = vpop.f32.mrb[0].mxu0
  %1486 = vmatprep.mubr.bf16.mxu0 0
  %1487 = vmatmul.mubr.bf16.gmra.mrb[0].mxu0 %v1389
  %v1488 = vpop.f32.mrb[0].mxu0
  %v1489 = vadd.f32 0.0, %v1488
  %v1490 = vpop.f32.mrb[0].mxu0
  %v1491 = vpop.f32.mrb[0].mxu0
  %v1492 = vadd.f32 0.0, %v1491
  %v1493 = vpop.f32.mrb[0].mxu0
  %1494 = vdwg.mxu0
  %vm1495 = vcmp.gt.f32.partialorder %v1433, 0.0
  %vm1496 = vcmp.gt.f32.partialorder %v1436, 0.0
  %vm1497 = vcmp.gt.f32.partialorder %v1441, 0.0
  %vm1498 = vcmp.gt.f32.partialorder %v1444, 0.0
  %vm1499 = vcmp.gt.f32.partialorder %v1449, 0.0
  %vm1500 = vcmp.gt.f32.partialorder %v1452, 0.0
  %vm1501 = vcmp.gt.f32.partialorder %v1457, 0.0
  %vm1502 = vcmp.gt.f32.partialorder %v1460, 0.0
  %vm1503 = vcmp.gt.f32.partialorder %v1465, 0.0
  %vm1504 = vcmp.gt.f32.partialorder %v1468, 0.0
  %vm1505 = vcmp.gt.f32.partialorder %v1473, 0.0
  %vm1506 = vcmp.gt.f32.partialorder %v1476, 0.0
  %vm1507 = vcmp.gt.f32.partialorder %v1481, 0.0
  %vm1508 = vcmp.gt.f32.partialorder %v1484, 0.0
  %vm1509 = vcmp.gt.f32.partialorder %v1489, 0.0
  %vm1510 = vcmp.gt.f32.partialorder %v1492, 0.0
  %v1511 = vmin.f32 %v1433, 0.0
  %v1512 = vmin.f32 %v1436, 0.0
  %v1513 = vmin.f32 %v1441, 0.0
  %v1514 = vmin.f32 %v1444, 0.0
  %v1515 = vmin.f32 %v1449, 0.0
  %v1516 = vmin.f32 %v1452, 0.0
  %v1517 = vmin.f32 %v1457, 0.0
  %v1518 = vmin.f32 %v1460, 0.0
  %v1519 = vmin.f32 %v1465, 0.0
  %v1520 = vmin.f32 %v1468, 0.0
  %v1521 = vmin.f32 %v1473, 0.0
  %v1522 = vmin.f32 %v1476, 0.0
  %v1523 = vmin.f32 %v1481, 0.0
  %v1524 = vmin.f32 %v1484, 0.0
  %v1525 = vmin.f32 %v1489, 0.0
  %v1526 = vmin.f32 %v1492, 0.0
  %v1527 = vmul.f32 %v1511, 1.442695
  %v1528 = vpow.pop %v1527
  %v1529 = vmul.f32 %v1512, 1.442695
  %v1530 = vpow.pop %v1529
  %v1531 = vmul.f32 %v1513, 1.442695
  %v1532 = vpow.pop %v1531
  %v1533 = vmul.f32 %v1514, 1.442695
  %v1534 = vpow.pop %v1533
  %v1535 = vmul.f32 %v1515, 1.442695
  %v1536 = vpow.pop %v1535
  %v1537 = vmul.f32 %v1516, 1.442695
  %v1538 = vpow.pop %v1537
  %v1539 = vmul.f32 %v1517, 1.442695
  %v1540 = vpow.pop %v1539
  %v1541 = vmul.f32 %v1518, 1.442695
  %v1542 = vpow.pop %v1541
  %v1543 = vmul.f32 %v1519, 1.442695
  %v1544 = vpow.pop %v1543
  %v1545 = vmul.f32 %v1520, 1.442695
  %v1546 = vpow.pop %v1545
  %v1547 = vmul.f32 %v1521, 1.442695
  %v1548 = vpow.pop %v1547
  %v1549 = vmul.f32 %v1522, 1.442695
  %v1550 = vpow.pop %v1549
  %v1551 = vmul.f32 %v1523, 1.442695
  %v1552 = vpow.pop %v1551
  %v1553 = vmul.f32 %v1524, 1.442695
  %v1554 = vpow.pop %v1553
  %v1555 = vmul.f32 %v1525, 1.442695
  %v1556 = vpow.pop %v1555
  %v1557 = vmul.f32 %v1526, 1.442695
  %v1558 = vpow.pop %v1557
  %v1559 = vsub.f32 %v1528, 1.0
  %v1560 = vsub.f32 %v1530, 1.0
  %v1561 = vsub.f32 %v1532, 1.0
  %v1562 = vsub.f32 %v1534, 1.0
  %v1563 = vsub.f32 %v1536, 1.0
  %v1564 = vsub.f32 %v1538, 1.0
  %v1565 = vsub.f32 %v1540, 1.0
  %v1566 = vsub.f32 %v1542, 1.0
  %v1567 = vsub.f32 %v1544, 1.0
  %v1568 = vsub.f32 %v1546, 1.0
  %v1569 = vsub.f32 %v1548, 1.0
  %v1570 = vsub.f32 %v1550, 1.0
  %v1571 = vsub.f32 %v1552, 1.0
  %v1572 = vsub.f32 %v1554, 1.0
  %v1573 = vsub.f32 %v1556, 1.0
  %v1574 = vsub.f32 %v1558, 1.0
  %v1575 = vsel %vm1495, %v1433, %v1559
  %v1576 = vsel %vm1496, %v1436, %v1560
  %v1577 = vsel %vm1497, %v1441, %v1561
  %v1578 = vsel %vm1498, %v1444, %v1562
  %v1579 = vsel %vm1499, %v1449, %v1563
  %v1580 = vsel %vm1500, %v1452, %v1564
  %v1581 = vsel %vm1501, %v1457, %v1565
  %v1582 = vsel %vm1502, %v1460, %v1566
  %v1583 = vsel %vm1503, %v1465, %v1567
  %v1584 = vsel %vm1504, %v1468, %v1568
  %v1585 = vsel %vm1505, %v1473, %v1569
  %v1586 = vsel %vm1506, %v1476, %v1570
  %v1587 = vsel %vm1507, %v1481, %v1571
  %v1588 = vsel %vm1508, %v1484, %v1572
  %v1589 = vsel %vm1509, %v1489, %v1573
  %v1590 = vsel %vm1510, %v1492, %v1574
  %v1591 = vld [vmem:[%s9] sm:$0xf]
  %v1592 = vmul.f32 %v1575, %v1575
  %v1593 = vmul.f32 %v1576, %v1576
  %v1594 = vmul.f32 %v1577, %v1577
  %v1595 = vmul.f32 %v1578, %v1578
  %v1596 = vmul.f32 %v1579, %v1579
  %v1597 = vmul.f32 %v1580, %v1580
  %v1598 = vmul.f32 %v1581, %v1581
  %v1599 = vmul.f32 %v1582, %v1582
  %v1600 = vmul.f32 %v1583, %v1583
  %v1601 = vmul.f32 %v1584, %v1584
  %v1602 = vmul.f32 %v1585, %v1585
  %v1603 = vmul.f32 %v1586, %v1586
  %v1604 = vmul.f32 %v1587, %v1587
  %v1605 = vmul.f32 %v1588, %v1588
  %v1606 = vmul.f32 %v1589, %v1589
  %v1607 = vmul.f32 %v1590, %v1590
  %1608 = vadd.xlane.f32.xlu0 %v1592
  %v1609 = vpop.xlane.xlu0 %1608
  %1610 = vadd.xlane.f32.xlu0 %v1593
  %v1611 = vpop.xlane.xlu0 %1610
  %1612 = vadd.xlane.f32.xlu0 %v1594
  %v1613 = vpop.xlane.xlu0 %1612
  %1614 = vadd.xlane.f32.xlu0 %v1595
  %v1615 = vpop.xlane.xlu0 %1614
  %1616 = vadd.xlane.f32.xlu0 %v1596
  %v1617 = vpop.xlane.xlu0 %1616
  %1618 = vadd.xlane.f32.xlu0 %v1597
  %v1619 = vpop.xlane.xlu0 %1618
  %1620 = vadd.xlane.f32.xlu0 %v1598
  %v1621 = vpop.xlane.xlu0 %1620
  %1622 = vadd.xlane.f32.xlu0 %v1599
  %v1623 = vpop.xlane.xlu0 %1622
  %1624 = vadd.xlane.f32.xlu0 %v1600
  %v1625 = vpop.xlane.xlu0 %1624
  %1626 = vadd.xlane.f32.xlu0 %v1601
  %v1627 = vpop.xlane.xlu0 %1626
  %1628 = vadd.xlane.f32.xlu0 %v1602
  %v1629 = vpop.xlane.xlu0 %1628
  %1630 = vadd.xlane.f32.xlu0 %v1603
  %v1631 = vpop.xlane.xlu0 %1630
  %1632 = vadd.xlane.f32.xlu0 %v1604
  %v1633 = vpop.xlane.xlu0 %1632
  %1634 = vadd.xlane.f32.xlu0 %v1605
  %v1635 = vpop.xlane.xlu0 %1634
  %1636 = vadd.xlane.f32.xlu0 %v1606
  %v1637 = vpop.xlane.xlu0 %1636
  %1638 = vadd.xlane.f32.xlu0 %v1607
  %v1639 = vpop.xlane.xlu0 %1638
  %v1640 = vmax.f32 %v1609, 1e-24
  %v1641 = vmax.f32 %v1611, 1e-24
  %v1642 = vmax.f32 %v1613, 1e-24
  %v1643 = vmax.f32 %v1615, 1e-24
  %v1644 = vmax.f32 %v1617, 1e-24
  %v1645 = vmax.f32 %v1619, 1e-24
  %v1646 = vmax.f32 %v1621, 1e-24
  %v1647 = vmax.f32 %v1623, 1e-24
  %v1648 = vmax.f32 %v1625, 1e-24
  %v1649 = vmax.f32 %v1627, 1e-24
  %v1650 = vmax.f32 %v1629, 1e-24
  %v1651 = vmax.f32 %v1631, 1e-24
  %v1652 = vmax.f32 %v1633, 1e-24
  %v1653 = vmax.f32 %v1635, 1e-24
  %v1654 = vmax.f32 %v1637, 1e-24
  %v1655 = vmax.f32 %v1639, 1e-24
  %v1656 = vrsqrt.pop %v1640
  %v1657 = vrsqrt.pop %v1641
  %v1658 = vrsqrt.pop %v1642
  %v1659 = vrsqrt.pop %v1643
  %v1660 = vrsqrt.pop %v1644
  %v1661 = vrsqrt.pop %v1645
  %v1662 = vrsqrt.pop %v1646
  %v1663 = vrsqrt.pop %v1647
  %v1664 = vrsqrt.pop %v1648
  %v1665 = vrsqrt.pop %v1649
  %v1666 = vrsqrt.pop %v1650
  %v1667 = vrsqrt.pop %v1651
  %v1668 = vrsqrt.pop %v1652
  %v1669 = vrsqrt.pop %v1653
  %v1670 = vrsqrt.pop %v1654
  %v1671 = vrsqrt.pop %v1655
  %v1672 = vmul.f32 %v1575, %v1656
  %v1673 = vmul.f32 %v1576, %v1657
  %v1674 = vmul.f32 %v1577, %v1658
  %v1675 = vmul.f32 %v1578, %v1659
  %v1676 = vmul.f32 %v1579, %v1660
  %v1677 = vmul.f32 %v1580, %v1661
  %v1678 = vmul.f32 %v1581, %v1662
  %v1679 = vmul.f32 %v1582, %v1663
  %v1680 = vmul.f32 %v1583, %v1664
  %v1681 = vmul.f32 %v1584, %v1665
  %v1682 = vmul.f32 %v1585, %v1666
  %v1683 = vmul.f32 %v1586, %v1667
  %v1684 = vmul.f32 %v1587, %v1668
  %v1685 = vmul.f32 %v1588, %v1669
  %v1686 = vmul.f32 %v1589, %v1670
  %v1687 = vmul.f32 %v1590, %v1671
  %v1688 = vmul.f32 %v1591, %v1591
  %vm1689 = vcmask 1043456
  %v1690 = vsel %vm1689, %v1688, 0.0
  %1691 = vadd.xlane.f32.xlu0 %v1690
  %v1692 = vpop.xlane.xlu0 %1691
  %1693 = vmatprep.subr.mxu0 0.0
  %1694 = vmatpush1.xpose.msra.mxu0 %v1591
  %1695 = vmatprep.subr.mxu0 0.0
  %1696 = vmatpush1.xpose.msra.mxu0 0.0
  %1697 = vmatprep.subr.mxu0 0.0
  %1698 = vmatpush1.xpose.msra.mxu0 0.0
  %1699 = vmatprep.subr.mxu0 0.0
  %1700 = vmatpush1.xpose.msra.mxu0 0.0
  %1701 = vmatprep.subr.mxu0 0.0
  %1702 = vmatpush1.xpose.msra.mxu0 0.0
  %1703 = vmatprep.subr.mxu0 0.0
  %1704 = vmatpush1.xpose.msra.mxu0 0.0
  %1705 = vmatprep.subr.mxu0 0.0
  %1706 = vmatpush1.xpose.msra.mxu0 0.0
  %1707 = vmatprep.subr.mxu0 0.0
  %1708 = vmatpush1.xpose.msra.mxu0 0.0
  %1709 = vmatprep.subr.mxu0 0.0
  %1710 = vmatpush1.xpose.msra.mxu0 0.0
  %1711 = vmatprep.subr.mxu0 0.0
  %1712 = vmatpush1.xpose.msra.mxu0 0.0
  %1713 = vmatprep.subr.mxu0 0.0
  %1714 = vmatpush1.xpose.msra.mxu0 0.0
  %1715 = vmatprep.subr.mxu0 0.0
  %1716 = vmatpush1.xpose.msra.mxu0 0.0
  %1717 = vmatprep.subr.mxu0 0.0
  %1718 = vmatpush1.xpose.msra.mxu0 0.0
  %1719 = vmatprep.subr.mxu0 0.0
  %1720 = vmatpush1.xpose.msra.mxu0 0.0
  %1721 = vmatprep.subr.mxu0 0.0
  %1722 = vmatpush1.xpose.msra.mxu0 0.0
  %1723 = vmatprep.subr.mxu0 0.0
  %1724 = vmatpush1.xpose.msra.mxu0 0.0
  %1725 = vmatprep.subr.mxu0 0.0
  %1726 = vmatpush1.xpose.msra.mxu0 0.0
  %1727 = vmatprep.subr.mxu0 0.0
  %1728 = vmatpush1.xpose.msra.mxu0 0.0
  %1729 = vmatprep.subr.mxu0 0.0
  %1730 = vmatpush1.xpose.msra.mxu0 0.0
  %1731 = vmatprep.subr.mxu0 0.0
  %1732 = vmatpush1.xpose.msra.mxu0 0.0
  %1733 = vmatprep.subr.mxu0 0.0
  %1734 = vmatpush1.xpose.msra.mxu0 0.0
  %1735 = vmatprep.subr.mxu0 0.0
  %1736 = vmatpush1.xpose.msra.mxu0 0.0
  %1737 = vmatprep.subr.mxu0 0.0
  %1738 = vmatpush1.xpose.msra.mxu0 0.0
  %1739 = vmatprep.subr.mxu0 0.0
  %1740 = vmatpush1.xpose.msra.mxu0 0.0
  %1741 = vmatprep.subr.mxu0 0.0
  %1742 = vmatpush1.xpose.msra.mxu0 0.0
  %1743 = vmatprep.subr.mxu0 0.0
  %1744 = vmatpush1.xpose.msra.mxu0 0.0
  %1745 = vmatprep.subr.mxu0 0.0
  %1746 = vmatpush1.xpose.msra.mxu0 0.0
  %1747 = vmatprep.subr.mxu0 0.0
  %1748 = vmatpush1.xpose.msra.mxu0 0.0
  %1749 = vmatprep.subr.mxu0 0.0
  %1750 = vmatpush1.xpose.msra.mxu0 0.0
  %1751 = vmatprep.subr.mxu0 0.0
  %1752 = vmatpush1.xpose.msra.mxu0 0.0
  %1753 = vmatprep.subr.mxu0 0.0
  %1754 = vmatpush1.xpose.msra.mxu0 0.0
  %1755 = vmatprep.subr.mxu0 0.0
  %1756 = vmatpush1.xpose.msra.mxu0 0.0
  %1757 = vmatprep.mubr.f32.mxu0 0.0
  %1758 = vmatmul.mubr.f32.gmra.mrb[0].mxu0 %v1672
  %v1759 = vpop.f32.mrb[0].mxu0
  %v1760 = vadd.f32 0.0, %v1759
  %v1761 = vpop.f32.mrb[0].mxu0
  %1762 = vmatprep.mubr.f32.mxu0 0.0
  %1763 = vmatmul.mubr.f32.gmra.mrb[0].mxu0 %v1673
  %v1764 = vpop.f32.mrb[0].mxu0
  %v1765 = vadd.f32 0.0, %v1764
  %v1766 = vpop.f32.mrb[0].mxu0
  %1767 = vmatprep.mubr.f32.mxu0 0.0
  %1768 = vmatmul.mubr.f32.gmra.mrb[0].mxu0 %v1674
  %v1769 = vpop.f32.mrb[0].mxu0
  %v1770 = vadd.f32 0.0, %v1769
  %v1771 = vpop.f32.mrb[0].mxu0
  %1772 = vmatprep.mubr.f32.mxu0 0.0
  %1773 = vmatmul.mubr.f32.gmra.mrb[0].mxu0 %v1675
  %v1774 = vpop.f32.mrb[0].mxu0
  %v1775 = vadd.f32 0.0, %v1774
  %v1776 = vpop.f32.mrb[0].mxu0
  %1777 = vmatprep.mubr.f32.mxu0 0.0
  %1778 = vmatmul.mubr.f32.gmra.mrb[0].mxu0 %v1676
  %v1779 = vpop.f32.mrb[0].mxu0
  %v1780 = vadd.f32 0.0, %v1779
  %v1781 = vpop.f32.mrb[0].mxu0
  %1782 = vmatprep.mubr.f32.mxu0 0.0
  %1783 = vmatmul.mubr.f32.gmra.mrb[0].mxu0 %v1677
  %v1784 = vpop.f32.mrb[0].mxu0
  %v1785 = vadd.f32 0.0, %v1784
  %v1786 = vpop.f32.mrb[0].mxu0
  %1787 = vmatprep.mubr.f32.mxu0 0.0
  %1788 = vmatmul.mubr.f32.gmra.mrb[0].mxu0 %v1678
  %v1789 = vpop.f32.mrb[0].mxu0
  %v1790 = vadd.f32 0.0, %v1789
  %v1791 = vpop.f32.mrb[0].mxu0
  %1792 = vmatprep.mubr.f32.mxu0 0.0
  %1793 = vmatmul.mubr.f32.gmra.mrb[0].mxu0 %v1679
  %v1794 = vpop.f32.mrb[0].mxu0
  %v1795 = vadd.f32 0.0, %v1794
  %v1796 = vpop.f32.mrb[0].mxu0
  %1797 = vmatprep.mubr.f32.mxu0 0.0
  %1798 = vmatmul.mubr.f32.gmra.mrb[0].mxu0 %v1680
  %v1799 = vpop.f32.mrb[0].mxu0
  %v1800 = vadd.f32 0.0, %v1799
  %v1801 = vpop.f32.mrb[0].mxu0
  %1802 = vmatprep.mubr.f32.mxu0 0.0
  %1803 = vmatmul.mubr.f32.gmra.mrb[0].mxu0 %v1681
  %v1804 = vpop.f32.mrb[0].mxu0
  %v1805 = vadd.f32 0.0, %v1804
  %v1806 = vpop.f32.mrb[0].mxu0
  %1807 = vmatprep.mubr.f32.mxu0 0.0
  %1808 = vmatmul.mubr.f32.gmra.mrb[0].mxu0 %v1682
  %v1809 = vpop.f32.mrb[0].mxu0
  %v1810 = vadd.f32 0.0, %v1809
  %v1811 = vpop.f32.mrb[0].mxu0
  %1812 = vmatprep.mubr.f32.mxu0 0.0
  %1813 = vmatmul.mubr.f32.gmra.mrb[0].mxu0 %v1683
  %v1814 = vpop.f32.mrb[0].mxu0
  %v1815 = vadd.f32 0.0, %v1814
  %v1816 = vpop.f32.mrb[0].mxu0
  %1817 = vmatprep.mubr.f32.mxu0 0.0
  %1818 = vmatmul.mubr.f32.gmra.mrb[0].mxu0 %v1684
  %v1819 = vpop.f32.mrb[0].mxu0
  %v1820 = vadd.f32 0.0, %v1819
  %v1821 = vpop.f32.mrb[0].mxu0
  %1822 = vmatprep.mubr.f32.mxu0 0.0
  %1823 = vmatmul.mubr.f32.gmra.mrb[0].mxu0 %v1685
  %v1824 = vpop.f32.mrb[0].mxu0
  %v1825 = vadd.f32 0.0, %v1824
  %v1826 = vpop.f32.mrb[0].mxu0
  %1827 = vmatprep.mubr.f32.mxu0 0.0
  %1828 = vmatmul.mubr.f32.gmra.mrb[0].mxu0 %v1686
  %v1829 = vpop.f32.mrb[0].mxu0
  %v1830 = vadd.f32 0.0, %v1829
  %v1831 = vpop.f32.mrb[0].mxu0
  %1832 = vmatprep.mubr.f32.mxu0 0.0
  %1833 = vmatmul.mubr.f32.gmra.mrb[0].mxu0 %v1687
  %v1834 = vpop.f32.mrb[0].mxu0
  %v1835 = vadd.f32 0.0, %v1834
  %v1836 = vpop.f32.mrb[0].mxu0
  %1837 = vdwg.mxu0
  %v1838 = vmul.f32 %v1760, 2.0
  %v1839 = vmul.f32 %v1765, 2.0
  %v1840 = vmul.f32 %v1770, 2.0
  %v1841 = vmul.f32 %v1775, 2.0
  %v1842 = vmul.f32 %v1780, 2.0
  %v1843 = vmul.f32 %v1785, 2.0
  %v1844 = vmul.f32 %v1790, 2.0
  %v1845 = vmul.f32 %v1795, 2.0
  %v1846 = vmul.f32 %v1800, 2.0
  %v1847 = vmul.f32 %v1805, 2.0
  %v1848 = vmul.f32 %v1810, 2.0
  %v1849 = vmul.f32 %v1815, 2.0
  %v1850 = vmul.f32 %v1820, 2.0
  %v1851 = vmul.f32 %v1825, 2.0
  %v1852 = vmul.f32 %v1830, 2.0
  %v1853 = vmul.f32 %v1835, 2.0
  %v1854 = vsub.f32 1.0, %v1838
  %v1855 = vsub.f32 1.0, %v1839
  %v1856 = vsub.f32 1.0, %v1840
  %v1857 = vsub.f32 1.0, %v1841
  %v1858 = vsub.f32 1.0, %v1842
  %v1859 = vsub.f32 1.0, %v1843
  %v1860 = vsub.f32 1.0, %v1844
  %v1861 = vsub.f32 1.0, %v1845
  %v1862 = vsub.f32 1.0, %v1846
  %v1863 = vsub.f32 1.0, %v1847
  %v1864 = vsub.f32 1.0, %v1848
  %v1865 = vsub.f32 1.0, %v1849
  %v1866 = vsub.f32 1.0, %v1850
  %v1867 = vsub.f32 1.0, %v1851
  %v1868 = vsub.f32 1.0, %v1852
  %v1869 = vsub.f32 1.0, %v1853
  %v1871 = vlaneseq
  %v1872 = vand.u32 %v1871, 127
  %v1873 = vlaneseq
  %v1874 = vshrl.u32 %v1873, 7
  %v1875 = vsub.s32 %v1872, %v1874
  %v1876 = vrot.slane %v1692, %v1875
  %vm1877 = vcmask 1042434
  %v1878 = vsel %vm1877, %v1876, %v1876
  %vm1879 = vcmask 1043459
  %v1880 = vsel %vm1879, %v1876, %v1878
  %vm1881 = vcmask 1044484
  %v1882 = vsel %vm1881, %v1876, %v1880
  %vm1883 = vcmask 1045509
  %v1884 = vsel %vm1883, %v1876, %v1882
  %vm1885 = vcmask 1046534
  %v1886 = vsel %vm1885, %v1876, %v1884
  %vm1887 = vcmask 1047559
  %v1888 = vsel %vm1887, %v1876, %v1886
  %v1890 = vadd.f32 %v1854, %v1888
  %v1891 = vadd.f32 %v1855, %v1888
  %v1892 = vadd.f32 %v1856, %v1888
  %v1893 = vadd.f32 %v1857, %v1888
  %v1894 = vadd.f32 %v1858, %v1888
  %v1895 = vadd.f32 %v1859, %v1888
  %v1896 = vadd.f32 %v1860, %v1888
  %v1897 = vadd.f32 %v1861, %v1888
  %v1898 = vadd.f32 %v1862, %v1888
  %v1899 = vadd.f32 %v1863, %v1888
  %v1900 = vadd.f32 %v1864, %v1888
  %v1901 = vadd.f32 %v1865, %v1888
  %v1902 = vadd.f32 %v1866, %v1888
  %v1903 = vadd.f32 %v1867, %v1888
  %v1904 = vadd.f32 %v1868, %v1888
  %v1905 = vadd.f32 %v1869, %v1888
  %v1906 = vmax.f32 %v1890, 0.0
  %v1907 = vmax.f32 %v1891, 0.0
  %v1908 = vmax.f32 %v1892, 0.0
  %v1909 = vmax.f32 %v1893, 0.0
  %v1910 = vmax.f32 %v1894, 0.0
  %v1911 = vmax.f32 %v1895, 0.0
  %v1912 = vmax.f32 %v1896, 0.0
  %v1913 = vmax.f32 %v1897, 0.0
  %v1914 = vmax.f32 %v1898, 0.0
  %v1915 = vmax.f32 %v1899, 0.0
  %v1916 = vmax.f32 %v1900, 0.0
  %v1917 = vmax.f32 %v1901, 0.0
  %v1918 = vmax.f32 %v1902, 0.0
  %v1919 = vmax.f32 %v1903, 0.0
  %v1920 = vmax.f32 %v1904, 0.0
  %v1921 = vmax.f32 %v1905, 0.0
  %v1922 = vadd.f32 %v1906, 1.0
  %v1923 = vadd.f32 %v1907, 1.0
  %v1924 = vadd.f32 %v1908, 1.0
  %v1925 = vadd.f32 %v1909, 1.0
  %v1926 = vadd.f32 %v1910, 1.0
  %v1927 = vadd.f32 %v1911, 1.0
  %v1928 = vadd.f32 %v1912, 1.0
  %v1929 = vadd.f32 %v1913, 1.0
  %v1930 = vadd.f32 %v1914, 1.0
  %v1931 = vadd.f32 %v1915, 1.0
  %v1932 = vadd.f32 %v1916, 1.0
  %v1933 = vadd.f32 %v1917, 1.0
  %v1934 = vadd.f32 %v1918, 1.0
  %v1935 = vadd.f32 %v1919, 1.0
  %v1936 = vadd.f32 %v1920, 1.0
  %v1937 = vadd.f32 %v1921, 1.0
  %v1938 = vrcp.pop %v1922
  %v1939 = vmul.f32 1.0, %v1938
  %v1940 = vrcp.pop %v1923
  %v1941 = vmul.f32 1.0, %v1940
  %v1942 = vrcp.pop %v1924
  %v1943 = vmul.f32 1.0, %v1942
  %v1944 = vrcp.pop %v1925
  %v1945 = vmul.f32 1.0, %v1944
  %v1946 = vrcp.pop %v1926
  %v1947 = vmul.f32 1.0, %v1946
  %v1948 = vrcp.pop %v1927
  %v1949 = vmul.f32 1.0, %v1948
  %v1950 = vrcp.pop %v1928
  %v1951 = vmul.f32 1.0, %v1950
  %v1952 = vrcp.pop %v1929
  %v1953 = vmul.f32 1.0, %v1952
  %v1954 = vrcp.pop %v1930
  %v1955 = vmul.f32 1.0, %v1954
  %v1956 = vrcp.pop %v1931
  %v1957 = vmul.f32 1.0, %v1956
  %v1958 = vrcp.pop %v1932
  %v1959 = vmul.f32 1.0, %v1958
  %v1960 = vrcp.pop %v1933
  %v1961 = vmul.f32 1.0, %v1960
  %v1962 = vrcp.pop %v1934
  %v1963 = vmul.f32 1.0, %v1962
  %v1964 = vrcp.pop %v1935
  %v1965 = vmul.f32 1.0, %v1964
  %v1966 = vrcp.pop %v1936
  %v1967 = vmul.f32 1.0, %v1966
  %v1968 = vrcp.pop %v1937
  %v1969 = vmul.f32 1.0, %v1968
  %vm1970 = vcmask 31744
  %v1971 = vsel %vm1970, %v1939, 0.0
  %1972 = vadd.xlane.f32.xlu0 %v1971
  %v1973 = vpop.xlane.xlu0 %1972
  %v1974 = vsel %vm1970, %v1941, 0.0
  %1975 = vadd.xlane.f32.xlu0 %v1974
  %v1976 = vpop.xlane.xlu0 %1975
  %v1977 = vsel %vm1970, %v1943, 0.0
  %1978 = vadd.xlane.f32.xlu0 %v1977
  %v1979 = vpop.xlane.xlu0 %1978
  %v1980 = vsel %vm1970, %v1945, 0.0
  %1981 = vadd.xlane.f32.xlu0 %v1980
  %v1982 = vpop.xlane.xlu0 %1981
  %v1983 = vsel %vm1970, %v1947, 0.0
  %1984 = vadd.xlane.f32.xlu0 %v1983
  %v1985 = vpop.xlane.xlu0 %1984
  %v1986 = vsel %vm1970, %v1949, 0.0
  %1987 = vadd.xlane.f32.xlu0 %v1986
  %v1988 = vpop.xlane.xlu0 %1987
  %v1989 = vsel %vm1970, %v1951, 0.0
  %1990 = vadd.xlane.f32.xlu0 %v1989
  %v1991 = vpop.xlane.xlu0 %1990
  %v1992 = vsel %vm1970, %v1953, 0.0
  %1993 = vadd.xlane.f32.xlu0 %v1992
  %v1994 = vpop.xlane.xlu0 %1993
  %v1995 = vsel %vm1970, %v1955, 0.0
  %1996 = vadd.xlane.f32.xlu0 %v1995
  %v1997 = vpop.xlane.xlu0 %1996
  %v1998 = vsel %vm1970, %v1957, 0.0
  %1999 = vadd.xlane.f32.xlu0 %v1998
  %v2000 = vpop.xlane.xlu0 %1999
  %v2001 = vsel %vm1970, %v1959, 0.0
  %2002 = vadd.xlane.f32.xlu0 %v2001
  %v2003 = vpop.xlane.xlu0 %2002
  %v2004 = vsel %vm1970, %v1961, 0.0
  %2005 = vadd.xlane.f32.xlu0 %v2004
  %v2006 = vpop.xlane.xlu0 %2005
  %v2007 = vsel %vm1970, %v1963, 0.0
  %2008 = vadd.xlane.f32.xlu0 %v2007
  %v2009 = vpop.xlane.xlu0 %2008
  %v2010 = vsel %vm1970, %v1965, 0.0
  %2011 = vadd.xlane.f32.xlu0 %v2010
  %v2012 = vpop.xlane.xlu0 %2011
  %v2013 = vsel %vm1970, %v1967, 0.0
  %2014 = vadd.xlane.f32.xlu0 %v2013
  %v2015 = vpop.xlane.xlu0 %2014
  %v2016 = vsel %vm1970, %v1969, 0.0
  %2017 = vadd.xlane.f32.xlu0 %v2016
  %v2018 = vpop.xlane.xlu0 %2017
  %v2019 = vrcp.pop %v1973
  %v2020 = vmul.f32 %v1939, %v2019
  %v2021 = vrcp.pop %v1976
  %v2022 = vmul.f32 %v1941, %v2021
  %v2023 = vrcp.pop %v1979
  %v2024 = vmul.f32 %v1943, %v2023
  %v2025 = vrcp.pop %v1982
  %v2026 = vmul.f32 %v1945, %v2025
  %v2027 = vrcp.pop %v1985
  %v2028 = vmul.f32 %v1947, %v2027
  %v2029 = vrcp.pop %v1988
  %v2030 = vmul.f32 %v1949, %v2029
  %v2031 = vrcp.pop %v1991
  %v2032 = vmul.f32 %v1951, %v2031
  %v2033 = vrcp.pop %v1994
  %v2034 = vmul.f32 %v1953, %v2033
  %v2035 = vrcp.pop %v1997
  %v2036 = vmul.f32 %v1955, %v2035
  %v2037 = vrcp.pop %v2000
  %v2038 = vmul.f32 %v1957, %v2037
  %v2039 = vrcp.pop %v2003
  %v2040 = vmul.f32 %v1959, %v2039
  %v2041 = vrcp.pop %v2006
  %v2042 = vmul.f32 %v1961, %v2041
  %v2043 = vrcp.pop %v2009
  %v2044 = vmul.f32 %v1963, %v2043
  %v2045 = vrcp.pop %v2012
  %v2046 = vmul.f32 %v1965, %v2045
  %v2047 = vrcp.pop %v2015
  %v2048 = vmul.f32 %v1967, %v2047
  %v2049 = vrcp.pop %v2018
  %v2050 = vmul.f32 %v1969, %v2049
  %2051 = vst [vmem:[%s10] sm:$0xff] %v1672
  %2052 = vst [vmem:[%s10 + $0x8] sm:$0xff] %v1673
  %2053 = vst [vmem:[%s10 + $0x10] sm:$0xff] %v1674
  %2054 = vst [vmem:[%s10 + $0x18] sm:$0xff] %v1675
  %2055 = vst [vmem:[%s10 + $0x20] sm:$0xff] %v1676
  %2056 = vst [vmem:[%s10 + $0x28] sm:$0xff] %v1677
  %2057 = vst [vmem:[%s10 + $0x30] sm:$0xff] %v1678
  %2058 = vst [vmem:[%s10 + $0x38] sm:$0xff] %v1679
  %2059 = vst [vmem:[%s10 + $0x40] sm:$0xff] %v1680
  %2060 = vst [vmem:[%s10 + $0x48] sm:$0xff] %v1681
  %2061 = vst [vmem:[%s10 + $0x50] sm:$0xff] %v1682
  %2062 = vst [vmem:[%s10 + $0x58] sm:$0xff] %v1683
  %2063 = vst [vmem:[%s10 + $0x60] sm:$0xff] %v1684
  %2064 = vst [vmem:[%s10 + $0x68] sm:$0xff] %v1685
  %2065 = vst [vmem:[%s10 + $0x70] sm:$0xff] %v1686
  %2066 = vst [vmem:[%s10 + $0x78] sm:$0xff] %v1687
  %2067 = vst.msk [vmem:[%s11] sm:$0xff] %vm1970, %v2020
  %2068 = vst.msk [vmem:[%s11 + $0x8] sm:$0xff] %vm1970, %v2022
  %2069 = vst.msk [vmem:[%s11 + $0x10] sm:$0xff] %vm1970, %v2024
  %2070 = vst.msk [vmem:[%s11 + $0x18] sm:$0xff] %vm1970, %v2026
  %2071 = vst.msk [vmem:[%s11 + $0x20] sm:$0xff] %vm1970, %v2028
  %2072 = vst.msk [vmem:[%s11 + $0x28] sm:$0xff] %vm1970, %v2030
  %2073 = vst.msk [vmem:[%s11 + $0x30] sm:$0xff] %vm1970, %v2032
  %2074 = vst.msk [vmem:[%s11 + $0x38] sm:$0xff] %vm1970, %v2034
  %2075 = vst.msk [vmem:[%s11 + $0x40] sm:$0xff] %vm1970, %v2036
  %2076 = vst.msk [vmem:[%s11 + $0x48] sm:$0xff] %vm1970, %v2038
  %2077 = vst.msk [vmem:[%s11 + $0x50] sm:$0xff] %vm1970, %v2040
  %2078 = vst.msk [vmem:[%s11 + $0x58] sm:$0xff] %vm1970, %v2042
  %2079 = vst.msk [vmem:[%s11 + $0x60] sm:$0xff] %vm1970, %v2044
  %2080 = vst.msk [vmem:[%s11 + $0x68] sm:$0xff] %vm1970, %v2046
  %2081 = vst.msk [vmem:[%s11 + $0x70] sm:$0xff] %vm1970, %v2048
  %2082 = vst.msk [vmem:[%s11 + $0x78] sm:$0xff] %vm1970, %v2050
  // Predicated region
  $region42: #{daegc_forward.2} parent=0 // pred_check
    _
  $region43: #{daegc_forward.2} parent=0 // pred_check_branch
    %2084 = sbr.rel (0) target = $region45
  $region44: #{daegc_forward.2} parent=0 // pred_region
    _
  $region45: #{daegc_forward.2} parent=0 // pred_fallthru
    _
  // Predicated region
  $region46: #{daegc_forward.2} parent=0 // pred_check
    _
  $region47: #{daegc_forward.2} parent=0 // pred_check_branch
    %2086 = sbr.rel (0) target = $region49
  $region48: #{daegc_forward.2} parent=0 // pred_region
    _
  $region49: #{daegc_forward.2} parent=0 // pred_fallthru
    _
  // Predicated region
  $region50: #{daegc_forward.2} parent=0 // pred_check
    _
  $region51: #{daegc_forward.2} parent=0 // pred_check_branch
    %2088 = sbr.rel (0) target = $region53
  $region52: #{daegc_forward.2} parent=0 // pred_region
    _
  $region53: #{daegc_forward.2} parent=0 // pred_fallthru
    _
  // Predicated region
  $region54: #{daegc_forward.2} parent=0 // pred_check
    _
  $region55: #{daegc_forward.2} parent=0 // pred_check_branch
    %2090 = sbr.rel (0) target = $region57
  $region56: #{daegc_forward.2} parent=0 // pred_region
    _
  $region57: #{daegc_forward.2} parent=0 // pred_fallthru
    _

</llo_original>
